<compile_context>
chip_gen: v6e
topology: v6e:2x2x1
jax: 0.10.0
libtpu: 0.0.40
codegen_flags: <defaults>
</compile_context>

<pallas_src>
import functools

import jax
import jax.numpy as jnp
from jax.experimental import pallas as pl
from jax.experimental.pallas import tpu as pltpu


_LANE = 128
# Per-grid-step working-set target: double-buffered patch/output tiles plus
# resident weights.  Fits comfortably inside the 32 MiB scoped-VMEM default on
# v6e/v7x (and the raised limit we request on v5e).
_VMEM_TILE_BUDGET = 20 * 1024 * 1024


def _round_up(x, m):
    return ((x + m - 1) // m) * m


# ----------------------------- Pallas kernel ------------------------------ #

def _matmul_bias_lrelu_kernel(p_ref, w_ref, b_ref, o_ref, *, neg_slope):
    """(TM, K) bf16 @ (K, Cp) bf16 on the MXU with f32 accumulation,
    then bias add + LeakyReLU in f32 on the VPU."""
    acc = jnp.dot(p_ref[...], w_ref[...], preferred_element_type=jnp.float32)
    acc = acc + b_ref[...]                                   # (1, Cp) broadcast
    out = jnp.where(acc >= 0.0, acc, jnp.float32(neg_slope) * acc)
    o_ref[...] = out.astype(o_ref.dtype)


def _pick_tile_m(m_rows, k, c_pad, out_bytes):
    """Largest M tile whose double-buffered footprint stays under budget."""
    cap = max(16, pl.next_power_of_2(max(m_rows, 1)))
    for tm in (1024, 512, 256, 128, 64, 32, 16):
        if tm > cap:
            continue
        footprint = (2 * (tm * k * 2)            # patch tile (bf16), 2 buffers
                     + k * c_pad * 2             # resident weights (bf16)
                     + c_pad * 4                 # resident bias (f32)
                     + 2 * (tm * c_pad * out_bytes))  # output tile, 2 buffers
        if footprint <= _VMEM_TILE_BUDGET:
            return tm
    return 16


def _conv4x4_pallas(x_nhwc, w_oihw, bias, stride, neg_slope, out_dtype):
    """4x4 conv, padding=1, given stride, fused bias + LeakyReLU (Pallas)."""
    N, H, W, Cin = x_nhwc.shape
    Cout = w_oihw.shape[0]
    Ho = (H + 2 - 4) // stride + 1
    Wo = (W + 2 - 4) // stride + 1
    K = 16 * Cin
    Cp = _round_up(Cout, _LANE)            # lane-dense output (unmasked vst)
    M = N * Ho * Wo

    # --- glue (XLA): zero-pad + im2col, done in bf16 to halve HBM traffic ---
    # TODO(synk): replace the XLA-side im2col with in-kernel tap extraction via
    # manual DMA (memory_space=pl.ANY) to remove the 4x/16x activation
    # expansion for real image sizes.
    xb = x_nhwc.astype(jnp.bfloat16)
    xp = jnp.pad(xb, ((0, 0), (1, 1), (1, 1), (0, 0)))
    taps = []
    for kh in range(4):
        for kw in range(4):
            taps.append(xp[:, kh:kh + stride * (Ho - 1) + 1:stride,
                              kw:kw + stride * (Wo - 1) + 1:stride, :])
    patches = jnp.stack(taps, axis=3).reshape(M, K)          # (M, K) bf16

    out_bytes = jnp.dtype(out_dtype).itemsize
    tm = _pick_tile_m(M, K, Cp, out_bytes)
    M_pad = _round_up(M, tm)
    if M_pad != M:
        patches = jnp.pad(patches, ((0, M_pad - M), (0, 0)))

    # weights (Cout, Cin, kh, kw) -> (kh, kw, Cin, Cout) -> (K, Cout) -> pad lanes
    w_mat = jnp.transpose(w_oihw, (2, 3, 1, 0)).reshape(K, Cout).astype(jnp.bfloat16)
    b2 = bias.reshape(1, Cout).astype(jnp.float32)
    if Cp != Cout:
        w_mat = jnp.pad(w_mat, ((0, 0), (0, Cp - Cout)))
        b2 = jnp.pad(b2, ((0, 0), (0, Cp - Cout)))

    grid_m = M_pad // tm
    cost = pl.CostEstimate(
        flops=2 * M_pad * K * Cp,
        transcendentals=0,
        bytes_accessed=M_pad * K * 2 + K * Cp * 2 + Cp * 4 + M_pad * Cp * out_bytes,
    )

    # --- hot path: M-tiled, pipelined matmul + bias + LeakyReLU -------------
    out = pl.pallas_call(
        functools.partial(_matmul_bias_lrelu_kernel, neg_slope=neg_slope),
        out_shape=jax.ShapeDtypeStruct((M_pad, Cp), out_dtype),
        grid=(grid_m,),
        in_specs=[
            pl.BlockSpec((tm, K), lambda i: (i, 0)),   # streamed patch tiles
            pl.BlockSpec((K, Cp), lambda i: (0, 0)),   # weights: VMEM-resident
            pl.BlockSpec((1, Cp), lambda i: (0, 0)),   # bias: VMEM-resident
        ],
        out_specs=pl.BlockSpec((tm, Cp), lambda i: (i, 0)),
        compiler_params=pltpu.CompilerParams(
            dimension_semantics=("parallel",),         # shard M tiles over TCs (v7x)
            vmem_limit_bytes=32 * 1024 * 1024,
        ),
        cost_estimate=cost,
    )(patches, w_mat, b2)

    return out[:M, :Cout].reshape(N, Ho, Wo, Cout)


# --------------------------- parameter handling ---------------------------- #

def _spectral_normalize(w_oihw, u, eps=1e-12):
    """One power-iteration step of spectral norm (torch training-forward
    semantics for a freshly-initialized module; u is not persisted here)."""
    cout = w_oihw.shape[0]
    wm = w_oihw.reshape(cout, -1)                     # (Cout, Cin*4*4)
    v = wm.T @ u
    v = v / jnp.maximum(jnp.linalg.norm(v), eps)
    u_new = wm @ v
    u_new = u_new / jnp.maximum(jnp.linalg.norm(u_new), eps)
    sigma = jnp.dot(u_new, wm @ v)
    return w_oihw / sigma


def make_params(key, in_channels, num_filters, num_layers=3):
    """Deterministic init: weights ~ N(0, 0.02) (init_type='normal'), bias = 0.
    Middle convs have no bias (norm_layer == BatchNorm2d => use_bias=False)."""
    cfgs = []  # (cin, cout, stride, has_bias, neg_slope)
    cfgs.append((in_channels, num_filters, 2, True, 0.2))
    nf_mult = 1
    for n in range(1, num_layers):
        nf_mult_prev, nf_mult = nf_mult, min(2 ** n, 8)
        cfgs.append((num_filters * nf_mult_prev, num_filters * nf_mult, 2, False, 0.2))
    nf_mult_prev, nf_mult = nf_mult, min(2 ** num_layers, 8)
    cfgs.append((num_filters * nf_mult_prev, num_filters * nf_mult, 1, False, 0.2))
    cfgs.append((num_filters * nf_mult, 1, 1, True, 1.0))    # slope 1.0 == identity

    params = []
    for (cin, cout, stride, has_bias, slope) in cfgs:
        key, kw, ku = jax.random.split(key, 3)
        w = 0.02 * jax.random.normal(kw, (cout, cin, 4, 4), dtype=jnp.float32)
        u = jax.random.normal(ku, (cout,), dtype=jnp.float32)
        u = u / jnp.maximum(jnp.linalg.norm(u), 1e-12)
        b = jnp.zeros((cout,), dtype=jnp.float32)     # biasless convs keep zeros
        params.append(dict(w=w, u=u, b=b, stride=stride, slope=slope))
    return params


# ------------------------------- forward ----------------------------------- #

def nlayer_discriminator_forward(x_nchw, params):
    """x_nchw: (N, C, H, W) float32 -> (N, 1, H', W') float32."""
    x = jnp.transpose(x_nchw, (0, 2, 3, 1))           # NCHW -> NHWC
    n_layers = len(params)
    for li, p in enumerate(params):
        w_sn = _spectral_normalize(p["w"], p["u"])
        last = li == n_layers - 1
        x = _conv4x4_pallas(x, w_sn, p["b"], p["stride"], p["slope"],
                            out_dtype=jnp.float32 if last else jnp.bfloat16)
    return jnp.transpose(x, (0, 3, 1, 2))             # NHWC -> NCHW


# --------------------------------- main ------------------------------------ #

if __name__ == "__main__":
    key = jax.random.PRNGKey(0)
    k_x, k_p = jax.random.split(key)

    in_channels, num_filters = 4, 8
    N, H, W = 2, 32, 32                               # 32x32 so all five 4x4 convs are valid
    x = jax.random.normal(k_x, (N, in_channels, H, W), dtype=jnp.float32)

    params = make_params(k_p, in_channels, num_filters, num_layers=3)

    fwd = jax.jit(lambda xx: nlayer_discriminator_forward(xx, params))
    out = fwd(x)
    jax.block_until_ready(out)

    assert out.shape == (N, 1, 2, 2), out.shape
    assert jnp.all(jnp.isfinite(out))
    print("KERNEL_OK")
</pallas_src>

<mosaic_0001>
module attributes {stable_mosaic.version = 11 : i64} {
  func.func @_matmul_bias_lrelu_kernel(%arg0: i32, %arg1: memref<512x64xbf16, #tpu.memory_space<vmem>>, %arg2: memref<64x128xbf16, #tpu.memory_space<vmem>>, %arg3: memref<1x128xf32, #tpu.memory_space<vmem>>, %arg4: memref<512x128xbf16, #tpu.memory_space<vmem>>) attributes {dimension_semantics = [#tpu.dimension_semantics<parallel>], iteration_bounds = array<i64: 1>, scalar_prefetch = 0 : i64, scratch_operands = 0 : i64, tpu.core_type = #tpu.core_type<tc>, window_params = [{transform_indices = @transform_0, window_bounds = array<i64: 512, 64>}, {pipeline_mode = #tpu.pipeline_mode<synchronous>, transform_indices = @transform_1, window_bounds = array<i64: 64, 128>}, {pipeline_mode = #tpu.pipeline_mode<synchronous>, transform_indices = @transform_2, window_bounds = array<i64: 1, 128>}, {transform_indices = @transform_3, window_bounds = array<i64: 512, 128>}]} {
    %c0 = arith.constant 0 : index
    %c0_0 = arith.constant 0 : index
    %0 = vector.load %arg1[%c0, %c0_0] : memref<512x64xbf16, #tpu.memory_space<vmem>>, vector<512x64xbf16>
    %c0_1 = arith.constant 0 : index
    %c0_2 = arith.constant 0 : index
    %1 = vector.load %arg2[%c0_1, %c0_2] : memref<64x128xbf16, #tpu.memory_space<vmem>>, vector<64x128xbf16>
    %cst = arith.constant dense<0.000000e+00> : vector<512x128xf32>
    %2 = tpu.matmul %0, %1, %cst {dimension_numbers = #tpu.dot_dimension_numbers<[1], [0], [0], [1], [0, 0, 1, 1], [], []>} : vector<512x64xbf16>, vector<64x128xbf16>, vector<512x128xf32> -> vector<512x128xf32>
    %c0_3 = arith.constant 0 : index
    %c0_4 = arith.constant 0 : index
    %3 = vector.load %arg3[%c0_3, %c0_4] : memref<1x128xf32, #tpu.memory_space<vmem>>, vector<1x128xf32>
    %4 = vector.broadcast %3 : vector<1x128xf32> to vector<512x128xf32>
    %5 = arith.addf %2, %4 : vector<512x128xf32>
    %cst_5 = arith.constant 0.000000e+00 : f32
    %6 = vector.broadcast %cst_5 : f32 to vector<512x128xf32>
    %7 = arith.cmpf oge, %5, %6 : vector<512x128xf32>
    %cst_6 = arith.constant 2.000000e-01 : f32
    %8 = vector.broadcast %cst_6 : f32 to vector<512x128xf32>
    %9 = arith.mulf %8, %5 : vector<512x128xf32>
    %10 = arith.select %7, %5, %9 : vector<512x128xi1>, vector<512x128xf32>
    %11 = arith.truncf %10 : vector<512x128xf32> to vector<512x128xbf16>
    %c0_7 = arith.constant 0 : index
    %c0_8 = arith.constant 0 : index
    %12 = vector.load %arg4[%c0_7, %c0_8] : memref<512x128xbf16, #tpu.memory_space<vmem>>, vector<512x128xbf16>
    tpu.vector_store %arg4[%c0_7, %c0_8], %11 {strides = array<i32>} : memref<512x128xbf16, #tpu.memory_space<vmem>>, vector<512x128xbf16>,
    return
  }
  func.func @transform_0(%arg0: i32) -> (i32, i32) {
    %c0_i32 = arith.constant 0 : i32
    %c0_i32_0 = arith.constant 0 : i32
    return %arg0, %c0_i32 : i32, i32
  }
  func.func @transform_1(%arg0: i32) -> (i32, i32) {
    %c0_i32 = arith.constant 0 : i32
    %c0_i32_0 = arith.constant 0 : i32
    %c0_i32_1 = arith.constant 0 : i32
    return %c0_i32, %c0_i32_0 : i32, i32
  }
  func.func @transform_2(%arg0: i32) -> (i32, i32) {
    %c0_i32 = arith.constant 0 : i32
    %c0_i32_0 = arith.constant 0 : i32
    %c0_i32_1 = arith.constant 0 : i32
    return %c0_i32, %c0_i32_0 : i32, i32
  }
  func.func @transform_3(%arg0: i32) -> (i32, i32) {
    %c0_i32 = arith.constant 0 : i32
    %c0_i32_0 = arith.constant 0 : i32
    return %arg0, %c0_i32 : i32, i32
  }
}

module attributes {stable_mosaic.version = 11 : i64} {
  func.func @_matmul_bias_lrelu_kernel(%arg0: i32, %arg1: memref<128x128xbf16, #tpu.memory_space<vmem>>, %arg2: memref<128x128xbf16, #tpu.memory_space<vmem>>, %arg3: memref<1x128xf32, #tpu.memory_space<vmem>>, %arg4: memref<128x128xbf16, #tpu.memory_space<vmem>>) attributes {dimension_semantics = [#tpu.dimension_semantics<parallel>], iteration_bounds = array<i64: 1>, scalar_prefetch = 0 : i64, scratch_operands = 0 : i64, tpu.core_type = #tpu.core_type<tc>, window_params = [{transform_indices = @transform_0, window_bounds = array<i64: 128, 128>}, {pipeline_mode = #tpu.pipeline_mode<synchronous>, transform_indices = @transform_1, window_bounds = array<i64: 128, 128>}, {pipeline_mode = #tpu.pipeline_mode<synchronous>, transform_indices = @transform_2, window_bounds = array<i64: 1, 128>}, {transform_indices = @transform_3, window_bounds = array<i64: 128, 128>}]} {
    %c0 = arith.constant 0 : index
    %c0_0 = arith.constant 0 : index
    %0 = vector.load %arg1[%c0, %c0_0] : memref<128x128xbf16, #tpu.memory_space<vmem>>, vector<128x128xbf16>
    %c0_1 = arith.constant 0 : index
    %c0_2 = arith.constant 0 : index
    %1 = vector.load %arg2[%c0_1, %c0_2] : memref<128x128xbf16, #tpu.memory_space<vmem>>, vector<128x128xbf16>
    %cst = arith.constant dense<0.000000e+00> : vector<128x128xf32>
    %2 = tpu.matmul %0, %1, %cst {dimension_numbers = #tpu.dot_dimension_numbers<[1], [0], [0], [1], [0, 0, 1, 1], [], []>} : vector<128x128xbf16>, vector<128x128xbf16>, vector<128x128xf32> -> vector<128x128xf32>
    %c0_3 = arith.constant 0 : index
    %c0_4 = arith.constant 0 : index
    %3 = vector.load %arg3[%c0_3, %c0_4] : memref<1x128xf32, #tpu.memory_space<vmem>>, vector<1x128xf32>
    %4 = vector.broadcast %3 : vector<1x128xf32> to vector<128x128xf32>
    %5 = arith.addf %2, %4 : vector<128x128xf32>
    %cst_5 = arith.constant 0.000000e+00 : f32
    %6 = vector.broadcast %cst_5 : f32 to vector<128x128xf32>
    %7 = arith.cmpf oge, %5, %6 : vector<128x128xf32>
    %cst_6 = arith.constant 2.000000e-01 : f32
    %8 = vector.broadcast %cst_6 : f32 to vector<128x128xf32>
    %9 = arith.mulf %8, %5 : vector<128x128xf32>
    %10 = arith.select %7, %5, %9 : vector<128x128xi1>, vector<128x128xf32>
    %11 = arith.truncf %10 : vector<128x128xf32> to vector<128x128xbf16>
    %c0_7 = arith.constant 0 : index
    %c0_8 = arith.constant 0 : index
    %12 = vector.load %arg4[%c0_7, %c0_8] : memref<128x128xbf16, #tpu.memory_space<vmem>>, vector<128x128xbf16>
    tpu.vector_store %arg4[%c0_7, %c0_8], %11 {strides = array<i32>} : memref<128x128xbf16, #tpu.memory_space<vmem>>, vector<128x128xbf16>,
    return
  }
  func.func @transform_0(%arg0: i32) -> (i32, i32) {
    %c0_i32 = arith.constant 0 : i32
    %c0_i32_0 = arith.constant 0 : i32
    return %arg0, %c0_i32 : i32, i32
  }
  func.func @transform_1(%arg0: i32) -> (i32, i32) {
    %c0_i32 = arith.constant 0 : i32
    %c0_i32_0 = arith.constant 0 : i32
    %c0_i32_1 = arith.constant 0 : i32
    return %c0_i32, %c0_i32_0 : i32, i32
  }
  func.func @transform_2(%arg0: i32) -> (i32, i32) {
    %c0_i32 = arith.constant 0 : i32
    %c0_i32_0 = arith.constant 0 : i32
    %c0_i32_1 = arith.constant 0 : i32
    return %c0_i32, %c0_i32_0 : i32, i32
  }
  func.func @transform_3(%arg0: i32) -> (i32, i32) {
    %c0_i32 = arith.constant 0 : i32
    %c0_i32_0 = arith.constant 0 : i32
    return %arg0, %c0_i32 : i32, i32
  }
}

module attributes {stable_mosaic.version = 11 : i64} {
  func.func @_matmul_bias_lrelu_kernel(%arg0: i32, %arg1: memref<32x256xbf16, #tpu.memory_space<vmem>>, %arg2: memref<256x128xbf16, #tpu.memory_space<vmem>>, %arg3: memref<1x128xf32, #tpu.memory_space<vmem>>, %arg4: memref<32x128xbf16, #tpu.memory_space<vmem>>) attributes {dimension_semantics = [#tpu.dimension_semantics<parallel>], iteration_bounds = array<i64: 1>, scalar_prefetch = 0 : i64, scratch_operands = 0 : i64, tpu.core_type = #tpu.core_type<tc>, window_params = [{transform_indices = @transform_0, window_bounds = array<i64: 32, 256>}, {pipeline_mode = #tpu.pipeline_mode<synchronous>, transform_indices = @transform_1, window_bounds = array<i64: 256, 128>}, {pipeline_mode = #tpu.pipeline_mode<synchronous>, transform_indices = @transform_2, window_bounds = array<i64: 1, 128>}, {transform_indices = @transform_3, window_bounds = array<i64: 32, 128>}]} {
    %c0 = arith.constant 0 : index
    %c0_0 = arith.constant 0 : index
    %0 = vector.load %arg1[%c0, %c0_0] : memref<32x256xbf16, #tpu.memory_space<vmem>>, vector<32x256xbf16>
    %c0_1 = arith.constant 0 : index
    %c0_2 = arith.constant 0 : index
    %1 = vector.load %arg2[%c0_1, %c0_2] : memref<256x128xbf16, #tpu.memory_space<vmem>>, vector<256x128xbf16>
    %cst = arith.constant dense<0.000000e+00> : vector<32x128xf32>
    %2 = tpu.matmul %0, %1, %cst {dimension_numbers = #tpu.dot_dimension_numbers<[1], [0], [0], [1], [0, 0, 1, 1], [], []>} : vector<32x256xbf16>, vector<256x128xbf16>, vector<32x128xf32> -> vector<32x128xf32>
    %c0_3 = arith.constant 0 : index
    %c0_4 = arith.constant 0 : index
    %3 = vector.load %arg3[%c0_3, %c0_4] : memref<1x128xf32, #tpu.memory_space<vmem>>, vector<1x128xf32>
    %4 = vector.broadcast %3 : vector<1x128xf32> to vector<32x128xf32>
    %5 = arith.addf %2, %4 : vector<32x128xf32>
    %cst_5 = arith.constant 0.000000e+00 : f32
    %6 = vector.broadcast %cst_5 : f32 to vector<32x128xf32>
    %7 = arith.cmpf oge, %5, %6 : vector<32x128xf32>
    %cst_6 = arith.constant 2.000000e-01 : f32
    %8 = vector.broadcast %cst_6 : f32 to vector<32x128xf32>
    %9 = arith.mulf %8, %5 : vector<32x128xf32>
    %10 = arith.select %7, %5, %9 : vector<32x128xi1>, vector<32x128xf32>
    %11 = arith.truncf %10 : vector<32x128xf32> to vector<32x128xbf16>
    %c0_7 = arith.constant 0 : index
    %c0_8 = arith.constant 0 : index
    %12 = vector.load %arg4[%c0_7, %c0_8] : memref<32x128xbf16, #tpu.memory_space<vmem>>, vector<32x128xbf16>
    tpu.vector_store %arg4[%c0_7, %c0_8], %11 {strides = array<i32>} : memref<32x128xbf16, #tpu.memory_space<vmem>>, vector<32x128xbf16>,
    return
  }
  func.func @transform_0(%arg0: i32) -> (i32, i32) {
    %c0_i32 = arith.constant 0 : i32
    %c0_i32_0 = arith.constant 0 : i32
    return %arg0, %c0_i32 : i32, i32
  }
  func.func @transform_1(%arg0: i32) -> (i32, i32) {
    %c0_i32 = arith.constant 0 : i32
    %c0_i32_0 = arith.constant 0 : i32
    %c0_i32_1 = arith.constant 0 : i32
    return %c0_i32, %c0_i32_0 : i32, i32
  }
  func.func @transform_2(%arg0: i32) -> (i32, i32) {
    %c0_i32 = arith.constant 0 : i32
    %c0_i32_0 = arith.constant 0 : i32
    %c0_i32_1 = arith.constant 0 : i32
    return %c0_i32, %c0_i32_0 : i32, i32
  }
  func.func @transform_3(%arg0: i32) -> (i32, i32) {
    %c0_i32 = arith.constant 0 : i32
    %c0_i32_0 = arith.constant 0 : i32
    return %arg0, %c0_i32 : i32, i32
  }
}

module attributes {stable_mosaic.version = 11 : i64} {
  func.func @_matmul_bias_lrelu_kernel(%arg0: i32, %arg1: memref<32x512xbf16, #tpu.memory_space<vmem>>, %arg2: memref<512x128xbf16, #tpu.memory_space<vmem>>, %arg3: memref<1x128xf32, #tpu.memory_space<vmem>>, %arg4: memref<32x128xbf16, #tpu.memory_space<vmem>>) attributes {dimension_semantics = [#tpu.dimension_semantics<parallel>], iteration_bounds = array<i64: 1>, scalar_prefetch = 0 : i64, scratch_operands = 0 : i64, tpu.core_type = #tpu.core_type<tc>, window_params = [{transform_indices = @transform_0, window_bounds = array<i64: 32, 512>}, {pipeline_mode = #tpu.pipeline_mode<synchronous>, transform_indices = @transform_1, window_bounds = array<i64: 512, 128>}, {pipeline_mode = #tpu.pipeline_mode<synchronous>, transform_indices = @transform_2, window_bounds = array<i64: 1, 128>}, {transform_indices = @transform_3, window_bounds = array<i64: 32, 128>}]} {
    %c0 = arith.constant 0 : index
    %c0_0 = arith.constant 0 : index
    %0 = vector.load %arg1[%c0, %c0_0] : memref<32x512xbf16, #tpu.memory_space<vmem>>, vector<32x512xbf16>
    %c0_1 = arith.constant 0 : index
    %c0_2 = arith.constant 0 : index
    %1 = vector.load %arg2[%c0_1, %c0_2] : memref<512x128xbf16, #tpu.memory_space<vmem>>, vector<512x128xbf16>
    %cst = arith.constant dense<0.000000e+00> : vector<32x128xf32>
    %2 = tpu.matmul %0, %1, %cst {dimension_numbers = #tpu.dot_dimension_numbers<[1], [0], [0], [1], [0, 0, 1, 1], [], []>} : vector<32x512xbf16>, vector<512x128xbf16>, vector<32x128xf32> -> vector<32x128xf32>
    %c0_3 = arith.constant 0 : index
    %c0_4 = arith.constant 0 : index
    %3 = vector.load %arg3[%c0_3, %c0_4] : memref<1x128xf32, #tpu.memory_space<vmem>>, vector<1x128xf32>
    %4 = vector.broadcast %3 : vector<1x128xf32> to vector<32x128xf32>
    %5 = arith.addf %2, %4 : vector<32x128xf32>
    %cst_5 = arith.constant 0.000000e+00 : f32
    %6 = vector.broadcast %cst_5 : f32 to vector<32x128xf32>
    %7 = arith.cmpf oge, %5, %6 : vector<32x128xf32>
    %cst_6 = arith.constant 2.000000e-01 : f32
    %8 = vector.broadcast %cst_6 : f32 to vector<32x128xf32>
    %9 = arith.mulf %8, %5 : vector<32x128xf32>
    %10 = arith.select %7, %5, %9 : vector<32x128xi1>, vector<32x128xf32>
    %11 = arith.truncf %10 : vector<32x128xf32> to vector<32x128xbf16>
    %c0_7 = arith.constant 0 : index
    %c0_8 = arith.constant 0 : index
    %12 = vector.load %arg4[%c0_7, %c0_8] : memref<32x128xbf16, #tpu.memory_space<vmem>>, vector<32x128xbf16>
    tpu.vector_store %arg4[%c0_7, %c0_8], %11 {strides = array<i32>} : memref<32x128xbf16, #tpu.memory_space<vmem>>, vector<32x128xbf16>,
    return
  }
  func.func @transform_0(%arg0: i32) -> (i32, i32) {
    %c0_i32 = arith.constant 0 : i32
    %c0_i32_0 = arith.constant 0 : i32
    return %arg0, %c0_i32 : i32, i32
  }
  func.func @transform_1(%arg0: i32) -> (i32, i32) {
    %c0_i32 = arith.constant 0 : i32
    %c0_i32_0 = arith.constant 0 : i32
    %c0_i32_1 = arith.constant 0 : i32
    return %c0_i32, %c0_i32_0 : i32, i32
  }
  func.func @transform_2(%arg0: i32) -> (i32, i32) {
    %c0_i32 = arith.constant 0 : i32
    %c0_i32_0 = arith.constant 0 : i32
    %c0_i32_1 = arith.constant 0 : i32
    return %c0_i32, %c0_i32_0 : i32, i32
  }
  func.func @transform_3(%arg0: i32) -> (i32, i32) {
    %c0_i32 = arith.constant 0 : i32
    %c0_i32_0 = arith.constant 0 : i32
    return %arg0, %c0_i32 : i32, i32
  }
}

module attributes {stable_mosaic.version = 11 : i64} {
  func.func @_matmul_bias_lrelu_kernel(%arg0: i32, %arg1: memref<16x1024xbf16, #tpu.memory_space<vmem>>, %arg2: memref<1024x128xbf16, #tpu.memory_space<vmem>>, %arg3: memref<1x128xf32, #tpu.memory_space<vmem>>, %arg4: memref<16x128xf32, #tpu.memory_space<vmem>>) attributes {dimension_semantics = [#tpu.dimension_semantics<parallel>], iteration_bounds = array<i64: 1>, scalar_prefetch = 0 : i64, scratch_operands = 0 : i64, tpu.core_type = #tpu.core_type<tc>, window_params = [{transform_indices = @transform_0, window_bounds = array<i64: 16, 1024>}, {pipeline_mode = #tpu.pipeline_mode<synchronous>, transform_indices = @transform_1, window_bounds = array<i64: 1024, 128>}, {pipeline_mode = #tpu.pipeline_mode<synchronous>, transform_indices = @transform_2, window_bounds = array<i64: 1, 128>}, {transform_indices = @transform_3, window_bounds = array<i64: 16, 128>}]} {
    %c0 = arith.constant 0 : index
    %c0_0 = arith.constant 0 : index
    %0 = vector.load %arg1[%c0, %c0_0] : memref<16x1024xbf16, #tpu.memory_space<vmem>>, vector<16x1024xbf16>
    %c0_1 = arith.constant 0 : index
    %c0_2 = arith.constant 0 : index
    %1 = vector.load %arg2[%c0_1, %c0_2] : memref<1024x128xbf16, #tpu.memory_space<vmem>>, vector<1024x128xbf16>
    %cst = arith.constant dense<0.000000e+00> : vector<16x128xf32>
    %2 = tpu.matmul %0, %1, %cst {dimension_numbers = #tpu.dot_dimension_numbers<[1], [0], [0], [1], [0, 0, 1, 1], [], []>} : vector<16x1024xbf16>, vector<1024x128xbf16>, vector<16x128xf32> -> vector<16x128xf32>
    %c0_3 = arith.constant 0 : index
    %c0_4 = arith.constant 0 : index
    %3 = vector.load %arg3[%c0_3, %c0_4] : memref<1x128xf32, #tpu.memory_space<vmem>>, vector<1x128xf32>
    %4 = vector.broadcast %3 : vector<1x128xf32> to vector<16x128xf32>
    %5 = arith.addf %2, %4 : vector<16x128xf32>
    %cst_5 = arith.constant 0.000000e+00 : f32
    %6 = vector.broadcast %cst_5 : f32 to vector<16x128xf32>
    %7 = arith.cmpf oge, %5, %6 : vector<16x128xf32>
    %cst_6 = arith.constant 1.000000e+00 : f32
    %8 = vector.broadcast %cst_6 : f32 to vector<16x128xf32>
    %9 = arith.mulf %8, %5 : vector<16x128xf32>
    %10 = arith.select %7, %5, %9 : vector<16x128xi1>, vector<16x128xf32>
    %c0_7 = arith.constant 0 : index
    %c0_8 = arith.constant 0 : index
    %11 = vector.load %arg4[%c0_7, %c0_8] : memref<16x128xf32, #tpu.memory_space<vmem>>, vector<16x128xf32>
    tpu.vector_store %arg4[%c0_7, %c0_8], %10 {strides = array<i32>} : memref<16x128xf32, #tpu.memory_space<vmem>>, vector<16x128xf32>,
    return
  }
  func.func @transform_0(%arg0: i32) -> (i32, i32) {
    %c0_i32 = arith.constant 0 : i32
    %c0_i32_0 = arith.constant 0 : i32
    return %arg0, %c0_i32 : i32, i32
  }
  func.func @transform_1(%arg0: i32) -> (i32, i32) {
    %c0_i32 = arith.constant 0 : i32
    %c0_i32_0 = arith.constant 0 : i32
    %c0_i32_1 = arith.constant 0 : i32
    return %c0_i32, %c0_i32_0 : i32, i32
  }
  func.func @transform_2(%arg0: i32) -> (i32, i32) {
    %c0_i32 = arith.constant 0 : i32
    %c0_i32_0 = arith.constant 0 : i32
    %c0_i32_1 = arith.constant 0 : i32
    return %c0_i32, %c0_i32_0 : i32, i32
  }
  func.func @transform_3(%arg0: i32) -> (i32, i32) {
    %c0_i32 = arith.constant 0 : i32
    %c0_i32_0 = arith.constant 0 : i32
    return %arg0, %c0_i32 : i32, i32
  }
}

</mosaic_0001>

<llo_original>
// kernel: _lambda_.5
$region0: #{_lambda_.5}
  #allocation0 [shape = 'u32[]', space=smem, size = 0x4, offset = 0x4, fixed_abs, tag = 'smem constant byte address 0x4 - core index']
  #allocation1 [shape = 'u32[144,128]{1,0:T(1,128)}', space=vmem, size = 0x12000, scoped, tag = 'internal scratch']
  %s0 = inlined_call_operand.vmem [shape: bf16[512,64], index: 0, kind: input, shape index: {}]
  %s1 = inlined_call_operand.vmem [shape: bf16[64,128], index: 1, kind: input, shape index: {}]
  %s2 = inlined_call_operand.vmem [shape: f32[1,128], index: 2, kind: input, shape index: {}]
  %s3 = inlined_call_operand.vmem [shape: bf16[512,128], index: 3, kind: output, shape index: {}]
  %s4 = sld [smem:[#allocation0]]
  $region22: #{_lambda_.5} parent=0
    _
  %s6 = ssub.s32 1, %s4
  %s7 = scalar_select 0, %s6, %s4
  // Predicated region
  $region2: #{_lambda_.5} parent=0 // pred_check
    _
  $region3: #{_lambda_.5} parent=0 // pred_check_branch
    %9 = sbr.rel (0) target = $region5
  $region4: #{_lambda_.5} parent=0 // pred_region
    _
  $region5: #{_lambda_.5} parent=0 // pred_fallthru
    _
  // Predicated region
  $region6: #{_lambda_.5} parent=0 // pred_check
    _
  $region7: #{_lambda_.5} parent=0 // pred_check_branch
    %11 = sbr.rel (0) target = $region9
  $region8: #{_lambda_.5} parent=0 // pred_region
    _
  $region9: #{_lambda_.5} parent=0 // pred_fallthru
    _
  // Predicated region
  $region10: #{_lambda_.5} parent=0 // pred_check
    _
  $region11: #{_lambda_.5} parent=0 // pred_check_branch
    %13 = sbr.rel (0) target = $region13
  $region12: #{_lambda_.5} parent=0 // pred_region
    _
  $region13: #{_lambda_.5} parent=0 // pred_fallthru
    _
  %v15 = vld [vmem:[%s0] sm:$0xf]
  %v16 = vld [vmem:[%s0 + $0x4] sm:$0xf]
  %v17 = vld [vmem:[%s0 + $0x8] sm:$0xf]
  %v18 = vld [vmem:[%s0 + $0xc] sm:$0xf]
  %v19 = vld [vmem:[%s0 + $0x10] sm:$0xf]
  %v20 = vld [vmem:[%s0 + $0x14] sm:$0xf]
  %v21 = vld [vmem:[%s0 + $0x18] sm:$0xf]
  %v22 = vld [vmem:[%s0 + $0x1c] sm:$0xf]
  %v23 = vld [vmem:[%s0 + $0x20] sm:$0xf]
  %v24 = vld [vmem:[%s0 + $0x24] sm:$0xf]
  %v25 = vld [vmem:[%s0 + $0x28] sm:$0xf]
  %v26 = vld [vmem:[%s0 + $0x2c] sm:$0xf]
  %v27 = vld [vmem:[%s0 + $0x30] sm:$0xf]
  %v28 = vld [vmem:[%s0 + $0x34] sm:$0xf]
  %v29 = vld [vmem:[%s0 + $0x38] sm:$0xf]
  %v30 = vld [vmem:[%s0 + $0x3c] sm:$0xf]
  %v31 = vld [vmem:[%s0 + $0x40] sm:$0xf]
  %v32 = vld [vmem:[%s0 + $0x44] sm:$0xf]
  %v33 = vld [vmem:[%s0 + $0x48] sm:$0xf]
  %v34 = vld [vmem:[%s0 + $0x4c] sm:$0xf]
  %v35 = vld [vmem:[%s0 + $0x50] sm:$0xf]
  %v36 = vld [vmem:[%s0 + $0x54] sm:$0xf]
  %v37 = vld [vmem:[%s0 + $0x58] sm:$0xf]
  %v38 = vld [vmem:[%s0 + $0x5c] sm:$0xf]
  %v39 = vld [vmem:[%s0 + $0x60] sm:$0xf]
  %v40 = vld [vmem:[%s0 + $0x64] sm:$0xf]
  %v41 = vld [vmem:[%s0 + $0x68] sm:$0xf]
  %v42 = vld [vmem:[%s0 + $0x6c] sm:$0xf]
  %v43 = vld [vmem:[%s0 + $0x70] sm:$0xf]
  %v44 = vld [vmem:[%s0 + $0x74] sm:$0xf]
  %v45 = vld [vmem:[%s0 + $0x78] sm:$0xf]
  %v46 = vld [vmem:[%s0 + $0x7c] sm:$0xf]
  %v47 = vld [vmem:[%s0 + $0x80] sm:$0xf]
  %v48 = vld [vmem:[%s0 + $0x84] sm:$0xf]
  %v49 = vld [vmem:[%s0 + $0x88] sm:$0xf]
  %v50 = vld [vmem:[%s0 + $0x8c] sm:$0xf]
  %v51 = vld [vmem:[%s0 + $0x90] sm:$0xf]
  %v52 = vld [vmem:[%s0 + $0x94] sm:$0xf]
  %v53 = vld [vmem:[%s0 + $0x98] sm:$0xf]
  %v54 = vld [vmem:[%s0 + $0x9c] sm:$0xf]
  %v55 = vld [vmem:[%s0 + $0xa0] sm:$0xf]
  %v56 = vld [vmem:[%s0 + $0xa4] sm:$0xf]
  %v57 = vld [vmem:[%s0 + $0xa8] sm:$0xf]
  %v58 = vld [vmem:[%s0 + $0xac] sm:$0xf]
  %v59 = vld [vmem:[%s0 + $0xb0] sm:$0xf]
  %v60 = vld [vmem:[%s0 + $0xb4] sm:$0xf]
  %v61 = vld [vmem:[%s0 + $0xb8] sm:$0xf]
  %v62 = vld [vmem:[%s0 + $0xbc] sm:$0xf]
  %v63 = vld [vmem:[%s0 + $0xc0] sm:$0xf]
  %v64 = vld [vmem:[%s0 + $0xc4] sm:$0xf]
  %v65 = vld [vmem:[%s0 + $0xc8] sm:$0xf]
  %v66 = vld [vmem:[%s0 + $0xcc] sm:$0xf]
  %v67 = vld [vmem:[%s0 + $0xd0] sm:$0xf]
  %v68 = vld [vmem:[%s0 + $0xd4] sm:$0xf]
  %v69 = vld [vmem:[%s0 + $0xd8] sm:$0xf]
  %v70 = vld [vmem:[%s0 + $0xdc] sm:$0xf]
  %v71 = vld [vmem:[%s0 + $0xe0] sm:$0xf]
  %v72 = vld [vmem:[%s0 + $0xe4] sm:$0xf]
  %v73 = vld [vmem:[%s0 + $0xe8] sm:$0xf]
  %v74 = vld [vmem:[%s0 + $0xec] sm:$0xf]
  %v75 = vld [vmem:[%s0 + $0xf0] sm:$0xf]
  %v76 = vld [vmem:[%s0 + $0xf4] sm:$0xf]
  %v77 = vld [vmem:[%s0 + $0xf8] sm:$0xf]
  %v78 = vld [vmem:[%s0 + $0xfc] sm:$0xf]
  %v79 = vld [vmem:[%s1] sm:$0xf]
  %v80 = vld [vmem:[%s1 + $0x4] sm:$0xf]
  %v81 = vld [vmem:[%s1 + $0x8] sm:$0xf]
  %v82 = vld [vmem:[%s1 + $0xc] sm:$0xf]
  %v83 = vld [vmem:[%s1 + $0x10] sm:$0xf]
  %v84 = vld [vmem:[%s1 + $0x14] sm:$0xf]
  %v85 = vld [vmem:[%s1 + $0x18] sm:$0xf]
  %v86 = vld [vmem:[%s1 + $0x1c] sm:$0xf]
  %v87 = vld [vmem:[%s2] sm:$0x1]
  %v89 = vlaneseq
  %v90 = vshrl.u32 %v89, 7
  %v91 = vsub.s32 0, %v90
  %v92 = vrot.slane %v87, %v91
  %v158 = vunpack.c.l.b16 %v15
  %v159 = vunpack.c.l.b16 %v16
  %v160 = vunpack.c.l.b16 %v17
  %v161 = vunpack.c.l.b16 %v18
  %v162 = vunpack.c.l.b16 %v19
  %v163 = vunpack.c.l.b16 %v20
  %v164 = vunpack.c.l.b16 %v21
  %v165 = vunpack.c.l.b16 %v22
  %v166 = vunpack.c.l.b16 %v23
  %v167 = vunpack.c.l.b16 %v24
  %v168 = vunpack.c.l.b16 %v25
  %v169 = vunpack.c.l.b16 %v26
  %v170 = vunpack.c.l.b16 %v27
  %v171 = vunpack.c.l.b16 %v28
  %v172 = vunpack.c.l.b16 %v29
  %v173 = vunpack.c.l.b16 %v30
  %v174 = vunpack.c.l.b16 %v31
  %v175 = vunpack.c.l.b16 %v32
  %v176 = vunpack.c.l.b16 %v33
  %v177 = vunpack.c.l.b16 %v34
  %v178 = vunpack.c.l.b16 %v35
  %v179 = vunpack.c.l.b16 %v36
  %v180 = vunpack.c.l.b16 %v37
  %v181 = vunpack.c.l.b16 %v38
  %v182 = vunpack.c.l.b16 %v39
  %v183 = vunpack.c.l.b16 %v40
  %v184 = vunpack.c.l.b16 %v41
  %v185 = vunpack.c.l.b16 %v42
  %v186 = vunpack.c.l.b16 %v43
  %v187 = vunpack.c.l.b16 %v44
  %v188 = vunpack.c.l.b16 %v45
  %v189 = vunpack.c.l.b16 %v46
  %v190 = vunpack.c.l.b16 %v47
  %v191 = vunpack.c.l.b16 %v48
  %v192 = vunpack.c.l.b16 %v49
  %v193 = vunpack.c.l.b16 %v50
  %v194 = vunpack.c.l.b16 %v51
  %v195 = vunpack.c.l.b16 %v52
  %v196 = vunpack.c.l.b16 %v53
  %v197 = vunpack.c.l.b16 %v54
  %v198 = vunpack.c.l.b16 %v55
  %v199 = vunpack.c.l.b16 %v56
  %v200 = vunpack.c.l.b16 %v57
  %v201 = vunpack.c.l.b16 %v58
  %v202 = vunpack.c.l.b16 %v59
  %v203 = vunpack.c.l.b16 %v60
  %v204 = vunpack.c.l.b16 %v61
  %v205 = vunpack.c.l.b16 %v62
  %v206 = vunpack.c.l.b16 %v63
  %v207 = vunpack.c.l.b16 %v64
  %v208 = vunpack.c.l.b16 %v65
  %v209 = vunpack.c.l.b16 %v66
  %v210 = vunpack.c.l.b16 %v67
  %v211 = vunpack.c.l.b16 %v68
  %v212 = vunpack.c.l.b16 %v69
  %v213 = vunpack.c.l.b16 %v70
  %v214 = vunpack.c.l.b16 %v71
  %v215 = vunpack.c.l.b16 %v72
  %v216 = vunpack.c.l.b16 %v73
  %v217 = vunpack.c.l.b16 %v74
  %v218 = vunpack.c.l.b16 %v75
  %v219 = vunpack.c.l.b16 %v76
  %v220 = vunpack.c.l.b16 %v77
  %v221 = vunpack.c.l.b16 %v78
  %v222 = vpack.c.b16 %v159, %v158
  %v223 = vpack.c.b16 %v161, %v160
  %v224 = vpack.c.b16 %v163, %v162
  %v225 = vpack.c.b16 %v165, %v164
  %v226 = vpack.c.b16 %v167, %v166
  %v227 = vpack.c.b16 %v169, %v168
  %v228 = vpack.c.b16 %v171, %v170
  %v229 = vpack.c.b16 %v173, %v172
  %v230 = vpack.c.b16 %v175, %v174
  %v231 = vpack.c.b16 %v177, %v176
  %v232 = vpack.c.b16 %v179, %v178
  %v233 = vpack.c.b16 %v181, %v180
  %v234 = vpack.c.b16 %v183, %v182
  %v235 = vpack.c.b16 %v185, %v184
  %v236 = vpack.c.b16 %v187, %v186
  %v237 = vpack.c.b16 %v189, %v188
  %v238 = vpack.c.b16 %v191, %v190
  %v239 = vpack.c.b16 %v193, %v192
  %v240 = vpack.c.b16 %v195, %v194
  %v241 = vpack.c.b16 %v197, %v196
  %v242 = vpack.c.b16 %v199, %v198
  %v243 = vpack.c.b16 %v201, %v200
  %v244 = vpack.c.b16 %v203, %v202
  %v245 = vpack.c.b16 %v205, %v204
  %v246 = vpack.c.b16 %v207, %v206
  %v247 = vpack.c.b16 %v209, %v208
  %v248 = vpack.c.b16 %v211, %v210
  %v249 = vpack.c.b16 %v213, %v212
  %v250 = vpack.c.b16 %v215, %v214
  %v251 = vpack.c.b16 %v217, %v216
  %v252 = vpack.c.b16 %v219, %v218
  %v253 = vpack.c.b16 %v221, %v220
  %v262 = vunpack.c.l.b16 %v79
  %v263 = vunpack.c.l.b16 %v80
  %v264 = vunpack.c.l.b16 %v81
  %v265 = vunpack.c.l.b16 %v82
  %v266 = vunpack.c.l.b16 %v83
  %v267 = vunpack.c.l.b16 %v84
  %v268 = vunpack.c.l.b16 %v85
  %v269 = vunpack.c.l.b16 %v86
  %v270 = vpack.c.b16 %v263, %v262
  %v271 = vpack.c.b16 %v265, %v264
  %v272 = vpack.c.b16 %v267, %v266
  %v273 = vpack.c.b16 %v269, %v268
  %vm278 = vcmask 523264
  %v280 = vsel %vm278, %v222, 0
  %v283 = vsel %vm278, %v223, 0
  %v286 = vsel %vm278, %v224, 0
  %v289 = vsel %vm278, %v225, 0
  %v292 = vsel %vm278, %v226, 0
  %v295 = vsel %vm278, %v227, 0
  %v298 = vsel %vm278, %v228, 0
  %v301 = vsel %vm278, %v229, 0
  %v304 = vsel %vm278, %v230, 0
  %v307 = vsel %vm278, %v231, 0
  %v310 = vsel %vm278, %v232, 0
  %v313 = vsel %vm278, %v233, 0
  %v316 = vsel %vm278, %v234, 0
  %v319 = vsel %vm278, %v235, 0
  %v322 = vsel %vm278, %v236, 0
  %v325 = vsel %vm278, %v237, 0
  %v328 = vsel %vm278, %v238, 0
  %v331 = vsel %vm278, %v239, 0
  %v334 = vsel %vm278, %v240, 0
  %v337 = vsel %vm278, %v241, 0
  %v340 = vsel %vm278, %v242, 0
  %v343 = vsel %vm278, %v243, 0
  %v346 = vsel %vm278, %v244, 0
  %v349 = vsel %vm278, %v245, 0
  %v352 = vsel %vm278, %v246, 0
  %v355 = vsel %vm278, %v247, 0
  %v358 = vsel %vm278, %v248, 0
  %v361 = vsel %vm278, %v249, 0
  %v364 = vsel %vm278, %v250, 0
  %v367 = vsel %vm278, %v251, 0
  %v370 = vsel %vm278, %v252, 0
  %v373 = vsel %vm278, %v253, 0
  %375 = vmatprep.subr.bf16.mxu0 0
  %376 = vmatpush1.bf16.msra.mxu0 0
  %377 = vmatprep.subr.bf16.mxu0 0
  %378 = vmatpush1.bf16.msra.mxu0 0
  %379 = vmatprep.subr.bf16.mxu0 0
  %380 = vmatpush1.bf16.msra.mxu0 0
  %381 = vmatprep.subr.bf16.mxu0 0
  %382 = vmatpush1.bf16.msra.mxu0 0
  %383 = vmatprep.subr.bf16.mxu0 0
  %384 = vmatpush1.bf16.msra.mxu0 %v273
  %385 = vmatprep.subr.bf16.mxu0 0
  %386 = vmatpush1.bf16.msra.mxu0 %v272
  %387 = vmatprep.subr.bf16.mxu0 0
  %388 = vmatpush1.bf16.msra.mxu0 %v271
  %389 = vmatprep.subr.bf16.mxu0 0
  %390 = vmatpush1.bf16.msra.mxu0 %v270
  %391 = vmatprep.subr.bf16.mxu0 0
  %392 = vmatpush2.bf16.msra.mxu0 0
  %393 = vmatprep.subr.bf16.mxu0 0
  %394 = vmatpush2.bf16.msra.mxu0 0
  %395 = vmatprep.subr.bf16.mxu0 0
  %396 = vmatpush2.bf16.msra.mxu0 0
  %397 = vmatprep.subr.bf16.mxu0 0
  %398 = vmatpush2.bf16.msra.mxu0 0
  %399 = vmatprep.subr.bf16.mxu0 0
  %400 = vmatpush2.bf16.msra.mxu0 0
  %401 = vmatprep.subr.bf16.mxu0 0
  %402 = vmatpush2.bf16.msra.mxu0 0
  %403 = vmatprep.subr.bf16.mxu0 0
  %404 = vmatpush2.bf16.msra.mxu0 0
  %405 = vmatprep.subr.bf16.mxu0 0
  %406 = vmatpush2.bf16.msra.mxu0 0
  %407 = vmatprep.mubr.bf16.mxu0 0
  %408 = vmatmul.mubr.bf16.gmra.mxu0 %v280
  %v409 = vpop.f32.mrf.mxu0
  %v410 = vadd.f32 %v92, %v409
  %v411 = vpop.f32.mrf.mxu0
  %v412 = vpop.f32.mrf.mxu0
  %v413 = vadd.f32 %v92, %v412
  %v414 = vpop.f32.mrf.mxu0
  %415 = vmatprep.mubr.bf16.mxu0 0
  %416 = vmatmul.mubr.bf16.gmra.mxu0 %v283
  %v417 = vpop.f32.mrf.mxu0
  %v418 = vadd.f32 %v92, %v417
  %v419 = vpop.f32.mrf.mxu0
  %v420 = vpop.f32.mrf.mxu0
  %v421 = vadd.f32 %v92, %v420
  %v422 = vpop.f32.mrf.mxu0
  %423 = vmatprep.mubr.bf16.mxu0 0
  %424 = vmatmul.mubr.bf16.gmra.mxu0 %v286
  %v425 = vpop.f32.mrf.mxu0
  %v426 = vadd.f32 %v92, %v425
  %v427 = vpop.f32.mrf.mxu0
  %v428 = vpop.f32.mrf.mxu0
  %v429 = vadd.f32 %v92, %v428
  %v430 = vpop.f32.mrf.mxu0
  %431 = vmatprep.mubr.bf16.mxu0 0
  %432 = vmatmul.mubr.bf16.gmra.mxu0 %v289
  %v433 = vpop.f32.mrf.mxu0
  %v434 = vadd.f32 %v92, %v433
  %v435 = vpop.f32.mrf.mxu0
  %v436 = vpop.f32.mrf.mxu0
  %v437 = vadd.f32 %v92, %v436
  %v438 = vpop.f32.mrf.mxu0
  %439 = vmatprep.mubr.bf16.mxu0 0
  %440 = vmatmul.mubr.bf16.gmra.mxu0 %v292
  %v441 = vpop.f32.mrf.mxu0
  %v442 = vadd.f32 %v92, %v441
  %v443 = vpop.f32.mrf.mxu0
  %v444 = vpop.f32.mrf.mxu0
  %v445 = vadd.f32 %v92, %v444
  %v446 = vpop.f32.mrf.mxu0
  %447 = vmatprep.mubr.bf16.mxu0 0
  %448 = vmatmul.mubr.bf16.gmra.mxu0 %v295
  %v449 = vpop.f32.mrf.mxu0
  %v450 = vadd.f32 %v92, %v449
  %v451 = vpop.f32.mrf.mxu0
  %v452 = vpop.f32.mrf.mxu0
  %v453 = vadd.f32 %v92, %v452
  %v454 = vpop.f32.mrf.mxu0
  %455 = vmatprep.mubr.bf16.mxu0 0
  %456 = vmatmul.mubr.bf16.gmra.mxu0 %v298
  %v457 = vpop.f32.mrf.mxu0
  %v458 = vadd.f32 %v92, %v457
  %v459 = vpop.f32.mrf.mxu0
  %v460 = vpop.f32.mrf.mxu0
  %v461 = vadd.f32 %v92, %v460
  %v462 = vpop.f32.mrf.mxu0
  %463 = vmatprep.mubr.bf16.mxu0 0
  %464 = vmatmul.mubr.bf16.gmra.mxu0 %v301
  %v465 = vpop.f32.mrf.mxu0
  %v466 = vadd.f32 %v92, %v465
  %v467 = vpop.f32.mrf.mxu0
  %v468 = vpop.f32.mrf.mxu0
  %v469 = vadd.f32 %v92, %v468
  %v470 = vpop.f32.mrf.mxu0
  %471 = vmatprep.mubr.bf16.mxu0 0
  %472 = vmatmul.mubr.bf16.gmra.mxu0 %v304
  %v473 = vpop.f32.mrf.mxu0
  %v474 = vadd.f32 %v92, %v473
  %v475 = vpop.f32.mrf.mxu0
  %v476 = vpop.f32.mrf.mxu0
  %v477 = vadd.f32 %v92, %v476
  %v478 = vpop.f32.mrf.mxu0
  %479 = vmatprep.mubr.bf16.mxu0 0
  %480 = vmatmul.mubr.bf16.gmra.mxu0 %v307
  %v481 = vpop.f32.mrf.mxu0
  %v482 = vadd.f32 %v92, %v481
  %v483 = vpop.f32.mrf.mxu0
  %v484 = vpop.f32.mrf.mxu0
  %v485 = vadd.f32 %v92, %v484
  %v486 = vpop.f32.mrf.mxu0
  %487 = vmatprep.mubr.bf16.mxu0 0
  %488 = vmatmul.mubr.bf16.gmra.mxu0 %v310
  %v489 = vpop.f32.mrf.mxu0
  %v490 = vadd.f32 %v92, %v489
  %v491 = vpop.f32.mrf.mxu0
  %v492 = vpop.f32.mrf.mxu0
  %v493 = vadd.f32 %v92, %v492
  %v494 = vpop.f32.mrf.mxu0
  %495 = vmatprep.mubr.bf16.mxu0 0
  %496 = vmatmul.mubr.bf16.gmra.mxu0 %v313
  %v497 = vpop.f32.mrf.mxu0
  %v498 = vadd.f32 %v92, %v497
  %v499 = vpop.f32.mrf.mxu0
  %v500 = vpop.f32.mrf.mxu0
  %v501 = vadd.f32 %v92, %v500
  %v502 = vpop.f32.mrf.mxu0
  %503 = vmatprep.mubr.bf16.mxu0 0
  %504 = vmatmul.mubr.bf16.gmra.mxu0 %v316
  %v505 = vpop.f32.mrf.mxu0
  %v506 = vadd.f32 %v92, %v505
  %v507 = vpop.f32.mrf.mxu0
  %v508 = vpop.f32.mrf.mxu0
  %v509 = vadd.f32 %v92, %v508
  %v510 = vpop.f32.mrf.mxu0
  %511 = vmatprep.mubr.bf16.mxu0 0
  %512 = vmatmul.mubr.bf16.gmra.mxu0 %v319
  %v513 = vpop.f32.mrf.mxu0
  %v514 = vadd.f32 %v92, %v513
  %v515 = vpop.f32.mrf.mxu0
  %v516 = vpop.f32.mrf.mxu0
  %v517 = vadd.f32 %v92, %v516
  %v518 = vpop.f32.mrf.mxu0
  %519 = vmatprep.mubr.bf16.mxu0 0
  %520 = vmatmul.mubr.bf16.gmra.mxu0 %v322
  %v521 = vpop.f32.mrf.mxu0
  %v522 = vadd.f32 %v92, %v521
  %v523 = vpop.f32.mrf.mxu0
  %v524 = vpop.f32.mrf.mxu0
  %v525 = vadd.f32 %v92, %v524
  %v526 = vpop.f32.mrf.mxu0
  %527 = vmatprep.mubr.bf16.mxu0 0
  %528 = vmatmul.mubr.bf16.gmra.mxu0 %v325
  %v529 = vpop.f32.mrf.mxu0
  %v530 = vadd.f32 %v92, %v529
  %v531 = vpop.f32.mrf.mxu0
  %v532 = vpop.f32.mrf.mxu0
  %v533 = vadd.f32 %v92, %v532
  %v534 = vpop.f32.mrf.mxu0
  %535 = vmatprep.mubr.bf16.mxu0 0
  %536 = vmatmul.mubr.bf16.gmra.mxu0 %v328
  %v537 = vpop.f32.mrf.mxu0
  %v538 = vadd.f32 %v92, %v537
  %v539 = vpop.f32.mrf.mxu0
  %v540 = vpop.f32.mrf.mxu0
  %v541 = vadd.f32 %v92, %v540
  %v542 = vpop.f32.mrf.mxu0
  %543 = vmatprep.mubr.bf16.mxu0 0
  %544 = vmatmul.mubr.bf16.gmra.mxu0 %v331
  %v545 = vpop.f32.mrf.mxu0
  %v546 = vadd.f32 %v92, %v545
  %v547 = vpop.f32.mrf.mxu0
  %v548 = vpop.f32.mrf.mxu0
  %v549 = vadd.f32 %v92, %v548
  %v550 = vpop.f32.mrf.mxu0
  %551 = vmatprep.mubr.bf16.mxu0 0
  %552 = vmatmul.mubr.bf16.gmra.mxu0 %v334
  %v553 = vpop.f32.mrf.mxu0
  %v554 = vadd.f32 %v92, %v553
  %v555 = vpop.f32.mrf.mxu0
  %v556 = vpop.f32.mrf.mxu0
  %v557 = vadd.f32 %v92, %v556
  %v558 = vpop.f32.mrf.mxu0
  %559 = vmatprep.mubr.bf16.mxu0 0
  %560 = vmatmul.mubr.bf16.gmra.mxu0 %v337
  %v561 = vpop.f32.mrf.mxu0
  %v562 = vadd.f32 %v92, %v561
  %v563 = vpop.f32.mrf.mxu0
  %v564 = vpop.f32.mrf.mxu0
  %v565 = vadd.f32 %v92, %v564
  %v566 = vpop.f32.mrf.mxu0
  %567 = vmatprep.mubr.bf16.mxu0 0
  %568 = vmatmul.mubr.bf16.gmra.mxu0 %v340
  %v569 = vpop.f32.mrf.mxu0
  %v570 = vadd.f32 %v92, %v569
  %v571 = vpop.f32.mrf.mxu0
  %v572 = vpop.f32.mrf.mxu0
  %v573 = vadd.f32 %v92, %v572
  %v574 = vpop.f32.mrf.mxu0
  %575 = vmatprep.mubr.bf16.mxu0 0
  %576 = vmatmul.mubr.bf16.gmra.mxu0 %v343
  %v577 = vpop.f32.mrf.mxu0
  %v578 = vadd.f32 %v92, %v577
  %v579 = vpop.f32.mrf.mxu0
  %v580 = vpop.f32.mrf.mxu0
  %v581 = vadd.f32 %v92, %v580
  %v582 = vpop.f32.mrf.mxu0
  %583 = vmatprep.mubr.bf16.mxu0 0
  %584 = vmatmul.mubr.bf16.gmra.mxu0 %v346
  %v585 = vpop.f32.mrf.mxu0
  %v586 = vadd.f32 %v92, %v585
  %v587 = vpop.f32.mrf.mxu0
  %v588 = vpop.f32.mrf.mxu0
  %v589 = vadd.f32 %v92, %v588
  %v590 = vpop.f32.mrf.mxu0
  %591 = vmatprep.mubr.bf16.mxu0 0
  %592 = vmatmul.mubr.bf16.gmra.mxu0 %v349
  %v593 = vpop.f32.mrf.mxu0
  %v594 = vadd.f32 %v92, %v593
  %v595 = vpop.f32.mrf.mxu0
  %v596 = vpop.f32.mrf.mxu0
  %v597 = vadd.f32 %v92, %v596
  %v598 = vpop.f32.mrf.mxu0
  %599 = vmatprep.mubr.bf16.mxu0 0
  %600 = vmatmul.mubr.bf16.gmra.mxu0 %v352
  %v601 = vpop.f32.mrf.mxu0
  %v602 = vadd.f32 %v92, %v601
  %v603 = vpop.f32.mrf.mxu0
  %v604 = vpop.f32.mrf.mxu0
  %v605 = vadd.f32 %v92, %v604
  %v606 = vpop.f32.mrf.mxu0
  %607 = vmatprep.mubr.bf16.mxu0 0
  %608 = vmatmul.mubr.bf16.gmra.mxu0 %v355
  %v609 = vpop.f32.mrf.mxu0
  %v610 = vadd.f32 %v92, %v609
  %v611 = vpop.f32.mrf.mxu0
  %v612 = vpop.f32.mrf.mxu0
  %v613 = vadd.f32 %v92, %v612
  %v614 = vpop.f32.mrf.mxu0
  %615 = vmatprep.mubr.bf16.mxu0 0
  %616 = vmatmul.mubr.bf16.gmra.mxu0 %v358
  %v617 = vpop.f32.mrf.mxu0
  %v618 = vadd.f32 %v92, %v617
  %v619 = vpop.f32.mrf.mxu0
  %v620 = vpop.f32.mrf.mxu0
  %v621 = vadd.f32 %v92, %v620
  %v622 = vpop.f32.mrf.mxu0
  %623 = vmatprep.mubr.bf16.mxu0 0
  %624 = vmatmul.mubr.bf16.gmra.mxu0 %v361
  %v625 = vpop.f32.mrf.mxu0
  %v626 = vadd.f32 %v92, %v625
  %v627 = vpop.f32.mrf.mxu0
  %v628 = vpop.f32.mrf.mxu0
  %v629 = vadd.f32 %v92, %v628
  %v630 = vpop.f32.mrf.mxu0
  %631 = vmatprep.mubr.bf16.mxu0 0
  %632 = vmatmul.mubr.bf16.gmra.mxu0 %v364
  %v633 = vpop.f32.mrf.mxu0
  %v634 = vadd.f32 %v92, %v633
  %v635 = vpop.f32.mrf.mxu0
  %v636 = vpop.f32.mrf.mxu0
  %v637 = vadd.f32 %v92, %v636
  %v638 = vpop.f32.mrf.mxu0
  %639 = vmatprep.mubr.bf16.mxu0 0
  %640 = vmatmul.mubr.bf16.gmra.mxu0 %v367
  %v641 = vpop.f32.mrf.mxu0
  %v642 = vadd.f32 %v92, %v641
  %v643 = vpop.f32.mrf.mxu0
  %v644 = vpop.f32.mrf.mxu0
  %v645 = vadd.f32 %v92, %v644
  %v646 = vpop.f32.mrf.mxu0
  %647 = vmatprep.mubr.bf16.mxu0 0
  %648 = vmatmul.mubr.bf16.gmra.mxu0 %v370
  %v649 = vpop.f32.mrf.mxu0
  %v650 = vadd.f32 %v92, %v649
  %v651 = vpop.f32.mrf.mxu0
  %v652 = vpop.f32.mrf.mxu0
  %v653 = vadd.f32 %v92, %v652
  %v654 = vpop.f32.mrf.mxu0
  %655 = vmatprep.mubr.bf16.mxu0 0
  %656 = vmatmul.mubr.bf16.gmra.mxu0 %v373
  %v657 = vpop.f32.mrf.mxu0
  %v658 = vadd.f32 %v92, %v657
  %v659 = vpop.f32.mrf.mxu0
  %v660 = vpop.f32.mrf.mxu0
  %v661 = vadd.f32 %v92, %v660
  %v662 = vpop.f32.mrf.mxu0
  %663 = vdwg.mxu0
  %vm664 = vcmp.ge.f32.partialorder %v410, 0.0
  %vm665 = vcmp.ge.f32.partialorder %v413, 0.0
  %vm666 = vcmp.ge.f32.partialorder %v418, 0.0
  %vm667 = vcmp.ge.f32.partialorder %v421, 0.0
  %vm668 = vcmp.ge.f32.partialorder %v426, 0.0
  %vm669 = vcmp.ge.f32.partialorder %v429, 0.0
  %vm670 = vcmp.ge.f32.partialorder %v434, 0.0
  %vm671 = vcmp.ge.f32.partialorder %v437, 0.0
  %vm672 = vcmp.ge.f32.partialorder %v442, 0.0
  %vm673 = vcmp.ge.f32.partialorder %v445, 0.0
  %vm674 = vcmp.ge.f32.partialorder %v450, 0.0
  %vm675 = vcmp.ge.f32.partialorder %v453, 0.0
  %vm676 = vcmp.ge.f32.partialorder %v458, 0.0
  %vm677 = vcmp.ge.f32.partialorder %v461, 0.0
  %vm678 = vcmp.ge.f32.partialorder %v466, 0.0
  %vm679 = vcmp.ge.f32.partialorder %v469, 0.0
  %vm680 = vcmp.ge.f32.partialorder %v474, 0.0
  %vm681 = vcmp.ge.f32.partialorder %v477, 0.0
  %vm682 = vcmp.ge.f32.partialorder %v482, 0.0
  %vm683 = vcmp.ge.f32.partialorder %v485, 0.0
  %vm684 = vcmp.ge.f32.partialorder %v490, 0.0
  %vm685 = vcmp.ge.f32.partialorder %v493, 0.0
  %vm686 = vcmp.ge.f32.partialorder %v498, 0.0
  %vm687 = vcmp.ge.f32.partialorder %v501, 0.0
  %vm688 = vcmp.ge.f32.partialorder %v506, 0.0
  %vm689 = vcmp.ge.f32.partialorder %v509, 0.0
  %vm690 = vcmp.ge.f32.partialorder %v514, 0.0
  %vm691 = vcmp.ge.f32.partialorder %v517, 0.0
  %vm692 = vcmp.ge.f32.partialorder %v522, 0.0
  %vm693 = vcmp.ge.f32.partialorder %v525, 0.0
  %vm694 = vcmp.ge.f32.partialorder %v530, 0.0
  %vm695 = vcmp.ge.f32.partialorder %v533, 0.0
  %vm696 = vcmp.ge.f32.partialorder %v538, 0.0
  %vm697 = vcmp.ge.f32.partialorder %v541, 0.0
  %vm698 = vcmp.ge.f32.partialorder %v546, 0.0
  %vm699 = vcmp.ge.f32.partialorder %v549, 0.0
  %vm700 = vcmp.ge.f32.partialorder %v554, 0.0
  %vm701 = vcmp.ge.f32.partialorder %v557, 0.0
  %vm702 = vcmp.ge.f32.partialorder %v562, 0.0
  %vm703 = vcmp.ge.f32.partialorder %v565, 0.0
  %vm704 = vcmp.ge.f32.partialorder %v570, 0.0
  %vm705 = vcmp.ge.f32.partialorder %v573, 0.0
  %vm706 = vcmp.ge.f32.partialorder %v578, 0.0
  %vm707 = vcmp.ge.f32.partialorder %v581, 0.0
  %vm708 = vcmp.ge.f32.partialorder %v586, 0.0
  %vm709 = vcmp.ge.f32.partialorder %v589, 0.0
  %vm710 = vcmp.ge.f32.partialorder %v594, 0.0
  %vm711 = vcmp.ge.f32.partialorder %v597, 0.0
  %vm712 = vcmp.ge.f32.partialorder %v602, 0.0
  %vm713 = vcmp.ge.f32.partialorder %v605, 0.0
  %vm714 = vcmp.ge.f32.partialorder %v610, 0.0
  %vm715 = vcmp.ge.f32.partialorder %v613, 0.0
  %vm716 = vcmp.ge.f32.partialorder %v618, 0.0
  %vm717 = vcmp.ge.f32.partialorder %v621, 0.0
  %vm718 = vcmp.ge.f32.partialorder %v626, 0.0
  %vm719 = vcmp.ge.f32.partialorder %v629, 0.0
  %vm720 = vcmp.ge.f32.partialorder %v634, 0.0
  %vm721 = vcmp.ge.f32.partialorder %v637, 0.0
  %vm722 = vcmp.ge.f32.partialorder %v642, 0.0
  %vm723 = vcmp.ge.f32.partialorder %v645, 0.0
  %vm724 = vcmp.ge.f32.partialorder %v650, 0.0
  %vm725 = vcmp.ge.f32.partialorder %v653, 0.0
  %vm726 = vcmp.ge.f32.partialorder %v658, 0.0
  %vm727 = vcmp.ge.f32.partialorder %v661, 0.0
  %v728 = vmul.f32 %v410, 0.2
  %v729 = vmul.f32 %v413, 0.2
  %v730 = vmul.f32 %v418, 0.2
  %v731 = vmul.f32 %v421, 0.2
  %v732 = vmul.f32 %v426, 0.2
  %v733 = vmul.f32 %v429, 0.2
  %v734 = vmul.f32 %v434, 0.2
  %v735 = vmul.f32 %v437, 0.2
  %v736 = vmul.f32 %v442, 0.2
  %v737 = vmul.f32 %v445, 0.2
  %v738 = vmul.f32 %v450, 0.2
  %v739 = vmul.f32 %v453, 0.2
  %v740 = vmul.f32 %v458, 0.2
  %v741 = vmul.f32 %v461, 0.2
  %v742 = vmul.f32 %v466, 0.2
  %v743 = vmul.f32 %v469, 0.2
  %v744 = vmul.f32 %v474, 0.2
  %v745 = vmul.f32 %v477, 0.2
  %v746 = vmul.f32 %v482, 0.2
  %v747 = vmul.f32 %v485, 0.2
  %v748 = vmul.f32 %v490, 0.2
  %v749 = vmul.f32 %v493, 0.2
  %v750 = vmul.f32 %v498, 0.2
  %v751 = vmul.f32 %v501, 0.2
  %v752 = vmul.f32 %v506, 0.2
  %v753 = vmul.f32 %v509, 0.2
  %v754 = vmul.f32 %v514, 0.2
  %v755 = vmul.f32 %v517, 0.2
  %v756 = vmul.f32 %v522, 0.2
  %v757 = vmul.f32 %v525, 0.2
  %v758 = vmul.f32 %v530, 0.2
  %v759 = vmul.f32 %v533, 0.2
  %v760 = vmul.f32 %v538, 0.2
  %v761 = vmul.f32 %v541, 0.2
  %v762 = vmul.f32 %v546, 0.2
  %v763 = vmul.f32 %v549, 0.2
  %v764 = vmul.f32 %v554, 0.2
  %v765 = vmul.f32 %v557, 0.2
  %v766 = vmul.f32 %v562, 0.2
  %v767 = vmul.f32 %v565, 0.2
  %v768 = vmul.f32 %v570, 0.2
  %v769 = vmul.f32 %v573, 0.2
  %v770 = vmul.f32 %v578, 0.2
  %v771 = vmul.f32 %v581, 0.2
  %v772 = vmul.f32 %v586, 0.2
  %v773 = vmul.f32 %v589, 0.2
  %v774 = vmul.f32 %v594, 0.2
  %v775 = vmul.f32 %v597, 0.2
  %v776 = vmul.f32 %v602, 0.2
  %v777 = vmul.f32 %v605, 0.2
  %v778 = vmul.f32 %v610, 0.2
  %v779 = vmul.f32 %v613, 0.2
  %v780 = vmul.f32 %v618, 0.2
  %v781 = vmul.f32 %v621, 0.2
  %v782 = vmul.f32 %v626, 0.2
  %v783 = vmul.f32 %v629, 0.2
  %v784 = vmul.f32 %v634, 0.2
  %v785 = vmul.f32 %v637, 0.2
  %v786 = vmul.f32 %v642, 0.2
  %v787 = vmul.f32 %v645, 0.2
  %v788 = vmul.f32 %v650, 0.2
  %v789 = vmul.f32 %v653, 0.2
  %v790 = vmul.f32 %v658, 0.2
  %v791 = vmul.f32 %v661, 0.2
  %v792 = vsel %vm664, %v410, %v728
  %v793 = vsel %vm665, %v413, %v729
  %v794 = vsel %vm666, %v418, %v730
  %v795 = vsel %vm667, %v421, %v731
  %v796 = vsel %vm668, %v426, %v732
  %v797 = vsel %vm669, %v429, %v733
  %v798 = vsel %vm670, %v434, %v734
  %v799 = vsel %vm671, %v437, %v735
  %v800 = vsel %vm672, %v442, %v736
  %v801 = vsel %vm673, %v445, %v737
  %v802 = vsel %vm674, %v450, %v738
  %v803 = vsel %vm675, %v453, %v739
  %v804 = vsel %vm676, %v458, %v740
  %v805 = vsel %vm677, %v461, %v741
  %v806 = vsel %vm678, %v466, %v742
  %v807 = vsel %vm679, %v469, %v743
  %v808 = vsel %vm680, %v474, %v744
  %v809 = vsel %vm681, %v477, %v745
  %v810 = vsel %vm682, %v482, %v746
  %v811 = vsel %vm683, %v485, %v747
  %v812 = vsel %vm684, %v490, %v748
  %v813 = vsel %vm685, %v493, %v749
  %v814 = vsel %vm686, %v498, %v750
  %v815 = vsel %vm687, %v501, %v751
  %v816 = vsel %vm688, %v506, %v752
  %v817 = vsel %vm689, %v509, %v753
  %v818 = vsel %vm690, %v514, %v754
  %v819 = vsel %vm691, %v517, %v755
  %v820 = vsel %vm692, %v522, %v756
  %v821 = vsel %vm693, %v525, %v757
  %v822 = vsel %vm694, %v530, %v758
  %v823 = vsel %vm695, %v533, %v759
  %v824 = vsel %vm696, %v538, %v760
  %v825 = vsel %vm697, %v541, %v761
  %v826 = vsel %vm698, %v546, %v762
  %v827 = vsel %vm699, %v549, %v763
  %v828 = vsel %vm700, %v554, %v764
  %v829 = vsel %vm701, %v557, %v765
  %v830 = vsel %vm702, %v562, %v766
  %v831 = vsel %vm703, %v565, %v767
  %v832 = vsel %vm704, %v570, %v768
  %v833 = vsel %vm705, %v573, %v769
  %v834 = vsel %vm706, %v578, %v770
  %v835 = vsel %vm707, %v581, %v771
  %v836 = vsel %vm708, %v586, %v772
  %v837 = vsel %vm709, %v589, %v773
  %v838 = vsel %vm710, %v594, %v774
  %v839 = vsel %vm711, %v597, %v775
  %v840 = vsel %vm712, %v602, %v776
  %v841 = vsel %vm713, %v605, %v777
  %v842 = vsel %vm714, %v610, %v778
  %v843 = vsel %vm715, %v613, %v779
  %v844 = vsel %vm716, %v618, %v780
  %v845 = vsel %vm717, %v621, %v781
  %v846 = vsel %vm718, %v626, %v782
  %v847 = vsel %vm719, %v629, %v783
  %v848 = vsel %vm720, %v634, %v784
  %v849 = vsel %vm721, %v637, %v785
  %v850 = vsel %vm722, %v642, %v786
  %v851 = vsel %vm723, %v645, %v787
  %v852 = vsel %vm724, %v650, %v788
  %v853 = vsel %vm725, %v653, %v789
  %v854 = vsel %vm726, %v658, %v790
  %v855 = vsel %vm727, %v661, %v791
  %v856 = vpack.c.bf16 %v793, %v792
  %v857 = vpack.c.bf16 %v795, %v794
  %v858 = vpack.c.bf16 %v797, %v796
  %v859 = vpack.c.bf16 %v799, %v798
  %v860 = vpack.c.bf16 %v801, %v800
  %v861 = vpack.c.bf16 %v803, %v802
  %v862 = vpack.c.bf16 %v805, %v804
  %v863 = vpack.c.bf16 %v807, %v806
  %v864 = vpack.c.bf16 %v809, %v808
  %v865 = vpack.c.bf16 %v811, %v810
  %v866 = vpack.c.bf16 %v813, %v812
  %v867 = vpack.c.bf16 %v815, %v814
  %v868 = vpack.c.bf16 %v817, %v816
  %v869 = vpack.c.bf16 %v819, %v818
  %v870 = vpack.c.bf16 %v821, %v820
  %v871 = vpack.c.bf16 %v823, %v822
  %v872 = vpack.c.bf16 %v825, %v824
  %v873 = vpack.c.bf16 %v827, %v826
  %v874 = vpack.c.bf16 %v829, %v828
  %v875 = vpack.c.bf16 %v831, %v830
  %v876 = vpack.c.bf16 %v833, %v832
  %v877 = vpack.c.bf16 %v835, %v834
  %v878 = vpack.c.bf16 %v837, %v836
  %v879 = vpack.c.bf16 %v839, %v838
  %v880 = vpack.c.bf16 %v841, %v840
  %v881 = vpack.c.bf16 %v843, %v842
  %v882 = vpack.c.bf16 %v845, %v844
  %v883 = vpack.c.bf16 %v847, %v846
  %v884 = vpack.c.bf16 %v849, %v848
  %v885 = vpack.c.bf16 %v851, %v850
  %v886 = vpack.c.bf16 %v853, %v852
  %v887 = vpack.c.bf16 %v855, %v854
  %v920 = vunpack.c.l.b16 %v856
  %v921 = vunpack.c.h.b16 %v856
  %v922 = vunpack.c.l.b16 %v857
  %v923 = vunpack.c.h.b16 %v857
  %v924 = vunpack.c.l.b16 %v858
  %v925 = vunpack.c.h.b16 %v858
  %v926 = vunpack.c.l.b16 %v859
  %v927 = vunpack.c.h.b16 %v859
  %v928 = vunpack.c.l.b16 %v860
  %v929 = vunpack.c.h.b16 %v860
  %v930 = vunpack.c.l.b16 %v861
  %v931 = vunpack.c.h.b16 %v861
  %v932 = vunpack.c.l.b16 %v862
  %v933 = vunpack.c.h.b16 %v862
  %v934 = vunpack.c.l.b16 %v863
  %v935 = vunpack.c.h.b16 %v863
  %v936 = vunpack.c.l.b16 %v864
  %v937 = vunpack.c.h.b16 %v864
  %v938 = vunpack.c.l.b16 %v865
  %v939 = vunpack.c.h.b16 %v865
  %v940 = vunpack.c.l.b16 %v866
  %v941 = vunpack.c.h.b16 %v866
  %v942 = vunpack.c.l.b16 %v867
  %v943 = vunpack.c.h.b16 %v867
  %v944 = vunpack.c.l.b16 %v868
  %v945 = vunpack.c.h.b16 %v868
  %v946 = vunpack.c.l.b16 %v869
  %v947 = vunpack.c.h.b16 %v869
  %v948 = vunpack.c.l.b16 %v870
  %v949 = vunpack.c.h.b16 %v870
  %v950 = vunpack.c.l.b16 %v871
  %v951 = vunpack.c.h.b16 %v871
  %v952 = vunpack.c.l.b16 %v872
  %v953 = vunpack.c.h.b16 %v872
  %v954 = vunpack.c.l.b16 %v873
  %v955 = vunpack.c.h.b16 %v873
  %v956 = vunpack.c.l.b16 %v874
  %v957 = vunpack.c.h.b16 %v874
  %v958 = vunpack.c.l.b16 %v875
  %v959 = vunpack.c.h.b16 %v875
  %v960 = vunpack.c.l.b16 %v876
  %v961 = vunpack.c.h.b16 %v876
  %v962 = vunpack.c.l.b16 %v877
  %v963 = vunpack.c.h.b16 %v877
  %v964 = vunpack.c.l.b16 %v878
  %v965 = vunpack.c.h.b16 %v878
  %v966 = vunpack.c.l.b16 %v879
  %v967 = vunpack.c.h.b16 %v879
  %v968 = vunpack.c.l.b16 %v880
  %v969 = vunpack.c.h.b16 %v880
  %v970 = vunpack.c.l.b16 %v881
  %v971 = vunpack.c.h.b16 %v881
  %v972 = vunpack.c.l.b16 %v882
  %v973 = vunpack.c.h.b16 %v882
  %v974 = vunpack.c.l.b16 %v883
  %v975 = vunpack.c.h.b16 %v883
  %v976 = vunpack.c.l.b16 %v884
  %v977 = vunpack.c.h.b16 %v884
  %v978 = vunpack.c.l.b16 %v885
  %v979 = vunpack.c.h.b16 %v885
  %v980 = vunpack.c.l.b16 %v886
  %v981 = vunpack.c.h.b16 %v886
  %v982 = vunpack.c.l.b16 %v887
  %v983 = vunpack.c.h.b16 %v887
  %v984 = vpack.c.b16 %v920, %v920
  %v985 = vpack.c.b16 %v921, %v921
  %v986 = vpack.c.b16 %v922, %v922
  %v987 = vpack.c.b16 %v923, %v923
  %v988 = vpack.c.b16 %v924, %v924
  %v989 = vpack.c.b16 %v925, %v925
  %v990 = vpack.c.b16 %v926, %v926
  %v991 = vpack.c.b16 %v927, %v927
  %v992 = vpack.c.b16 %v928, %v928
  %v993 = vpack.c.b16 %v929, %v929
  %v994 = vpack.c.b16 %v930, %v930
  %v995 = vpack.c.b16 %v931, %v931
  %v996 = vpack.c.b16 %v932, %v932
  %v997 = vpack.c.b16 %v933, %v933
  %v998 = vpack.c.b16 %v934, %v934
  %v999 = vpack.c.b16 %v935, %v935
  %v1000 = vpack.c.b16 %v936, %v936
  %v1001 = vpack.c.b16 %v937, %v937
  %v1002 = vpack.c.b16 %v938, %v938
  %v1003 = vpack.c.b16 %v939, %v939
  %v1004 = vpack.c.b16 %v940, %v940
  %v1005 = vpack.c.b16 %v941, %v941
  %v1006 = vpack.c.b16 %v942, %v942
  %v1007 = vpack.c.b16 %v943, %v943
  %v1008 = vpack.c.b16 %v944, %v944
  %v1009 = vpack.c.b16 %v945, %v945
  %v1010 = vpack.c.b16 %v946, %v946
  %v1011 = vpack.c.b16 %v947, %v947
  %v1012 = vpack.c.b16 %v948, %v948
  %v1013 = vpack.c.b16 %v949, %v949
  %v1014 = vpack.c.b16 %v950, %v950
  %v1015 = vpack.c.b16 %v951, %v951
  %v1016 = vpack.c.b16 %v952, %v952
  %v1017 = vpack.c.b16 %v953, %v953
  %v1018 = vpack.c.b16 %v954, %v954
  %v1019 = vpack.c.b16 %v955, %v955
  %v1020 = vpack.c.b16 %v956, %v956
  %v1021 = vpack.c.b16 %v957, %v957
  %v1022 = vpack.c.b16 %v958, %v958
  %v1023 = vpack.c.b16 %v959, %v959
  %v1024 = vpack.c.b16 %v960, %v960
  %v1025 = vpack.c.b16 %v961, %v961
  %v1026 = vpack.c.b16 %v962, %v962
  %v1027 = vpack.c.b16 %v963, %v963
  %v1028 = vpack.c.b16 %v964, %v964
  %v1029 = vpack.c.b16 %v965, %v965
  %v1030 = vpack.c.b16 %v966, %v966
  %v1031 = vpack.c.b16 %v967, %v967
  %v1032 = vpack.c.b16 %v968, %v968
  %v1033 = vpack.c.b16 %v969, %v969
  %v1034 = vpack.c.b16 %v970, %v970
  %v1035 = vpack.c.b16 %v971, %v971
  %v1036 = vpack.c.b16 %v972, %v972
  %v1037 = vpack.c.b16 %v973, %v973
  %v1038 = vpack.c.b16 %v974, %v974
  %v1039 = vpack.c.b16 %v975, %v975
  %v1040 = vpack.c.b16 %v976, %v976
  %v1041 = vpack.c.b16 %v977, %v977
  %v1042 = vpack.c.b16 %v978, %v978
  %v1043 = vpack.c.b16 %v979, %v979
  %v1044 = vpack.c.b16 %v980, %v980
  %v1045 = vpack.c.b16 %v981, %v981
  %v1046 = vpack.c.b16 %v982, %v982
  %v1047 = vpack.c.b16 %v983, %v983
  %1112 = vst [vmem:[%s3] sm:$0xf] %v984
  %1113 = vst [vmem:[%s3 + $0x4] sm:$0xf] %v985
  %1114 = vst [vmem:[%s3 + $0x8] sm:$0xf] %v986
  %1115 = vst [vmem:[%s3 + $0xc] sm:$0xf] %v987
  %1116 = vst [vmem:[%s3 + $0x10] sm:$0xf] %v988
  %1117 = vst [vmem:[%s3 + $0x14] sm:$0xf] %v989
  %1118 = vst [vmem:[%s3 + $0x18] sm:$0xf] %v990
  %1119 = vst [vmem:[%s3 + $0x1c] sm:$0xf] %v991
  %1120 = vst [vmem:[%s3 + $0x20] sm:$0xf] %v992
  %1121 = vst [vmem:[%s3 + $0x24] sm:$0xf] %v993
  %1122 = vst [vmem:[%s3 + $0x28] sm:$0xf] %v994
  %1123 = vst [vmem:[%s3 + $0x2c] sm:$0xf] %v995
  %1124 = vst [vmem:[%s3 + $0x30] sm:$0xf] %v996
  %1125 = vst [vmem:[%s3 + $0x34] sm:$0xf] %v997
  %1126 = vst [vmem:[%s3 + $0x38] sm:$0xf] %v998
  %1127 = vst [vmem:[%s3 + $0x3c] sm:$0xf] %v999
  %1128 = vst [vmem:[%s3 + $0x40] sm:$0xf] %v1000
  %1129 = vst [vmem:[%s3 + $0x44] sm:$0xf] %v1001
  %1130 = vst [vmem:[%s3 + $0x48] sm:$0xf] %v1002
  %1131 = vst [vmem:[%s3 + $0x4c] sm:$0xf] %v1003
  %1132 = vst [vmem:[%s3 + $0x50] sm:$0xf] %v1004
  %1133 = vst [vmem:[%s3 + $0x54] sm:$0xf] %v1005
  %1134 = vst [vmem:[%s3 + $0x58] sm:$0xf] %v1006
  %1135 = vst [vmem:[%s3 + $0x5c] sm:$0xf] %v1007
  %1136 = vst [vmem:[%s3 + $0x60] sm:$0xf] %v1008
  %1137 = vst [vmem:[%s3 + $0x64] sm:$0xf] %v1009
  %1138 = vst [vmem:[%s3 + $0x68] sm:$0xf] %v1010
  %1139 = vst [vmem:[%s3 + $0x6c] sm:$0xf] %v1011
  %1140 = vst [vmem:[%s3 + $0x70] sm:$0xf] %v1012
  %1141 = vst [vmem:[%s3 + $0x74] sm:$0xf] %v1013
  %1142 = vst [vmem:[%s3 + $0x78] sm:$0xf] %v1014
  %1143 = vst [vmem:[%s3 + $0x7c] sm:$0xf] %v1015
  %1144 = vst [vmem:[%s3 + $0x80] sm:$0xf] %v1016
  %1145 = vst [vmem:[%s3 + $0x84] sm:$0xf] %v1017
  %1146 = vst [vmem:[%s3 + $0x88] sm:$0xf] %v1018
  %1147 = vst [vmem:[%s3 + $0x8c] sm:$0xf] %v1019
  %1148 = vst [vmem:[%s3 + $0x90] sm:$0xf] %v1020
  %1149 = vst [vmem:[%s3 + $0x94] sm:$0xf] %v1021
  %1150 = vst [vmem:[%s3 + $0x98] sm:$0xf] %v1022
  %1151 = vst [vmem:[%s3 + $0x9c] sm:$0xf] %v1023
  %1152 = vst [vmem:[%s3 + $0xa0] sm:$0xf] %v1024
  %1153 = vst [vmem:[%s3 + $0xa4] sm:$0xf] %v1025
  %1154 = vst [vmem:[%s3 + $0xa8] sm:$0xf] %v1026
  %1155 = vst [vmem:[%s3 + $0xac] sm:$0xf] %v1027
  %1156 = vst [vmem:[%s3 + $0xb0] sm:$0xf] %v1028
  %1157 = vst [vmem:[%s3 + $0xb4] sm:$0xf] %v1029
  %1158 = vst [vmem:[%s3 + $0xb8] sm:$0xf] %v1030
  %1159 = vst [vmem:[%s3 + $0xbc] sm:$0xf] %v1031
  %1160 = vst [vmem:[%s3 + $0xc0] sm:$0xf] %v1032
  %1161 = vst [vmem:[%s3 + $0xc4] sm:$0xf] %v1033
  %1162 = vst [vmem:[%s3 + $0xc8] sm:$0xf] %v1034
  %1163 = vst [vmem:[%s3 + $0xcc] sm:$0xf] %v1035
  %1164 = vst [vmem:[%s3 + $0xd0] sm:$0xf] %v1036
  %1165 = vst [vmem:[%s3 + $0xd4] sm:$0xf] %v1037
  %1166 = vst [vmem:[%s3 + $0xd8] sm:$0xf] %v1038
  %1167 = vst [vmem:[%s3 + $0xdc] sm:$0xf] %v1039
  %1168 = vst [vmem:[%s3 + $0xe0] sm:$0xf] %v1040
  %1169 = vst [vmem:[%s3 + $0xe4] sm:$0xf] %v1041
  %1170 = vst [vmem:[%s3 + $0xe8] sm:$0xf] %v1042
  %1171 = vst [vmem:[%s3 + $0xec] sm:$0xf] %v1043
  %1172 = vst [vmem:[%s3 + $0xf0] sm:$0xf] %v1044
  %1173 = vst [vmem:[%s3 + $0xf4] sm:$0xf] %v1045
  %1174 = vst [vmem:[%s3 + $0xf8] sm:$0xf] %v1046
  %1175 = vst [vmem:[%s3 + $0xfc] sm:$0xf] %v1047
  // Predicated region
  $region14: #{_lambda_.5} parent=0 // pred_check
    _
  $region15: #{_lambda_.5} parent=0 // pred_check_branch
    %1177 = sbr.rel (0) target = $region17
  $region16: #{_lambda_.5} parent=0 // pred_region
    _
  $region17: #{_lambda_.5} parent=0 // pred_fallthru
    _
  // Predicated region
  $region18: #{_lambda_.5} parent=0 // pred_check
    _
  $region19: #{_lambda_.5} parent=0 // pred_check_branch
    %1179 = sbr.rel (0) target = $region21
  $region20: #{_lambda_.5} parent=0 // pred_region
    _
  $region21: #{_lambda_.5} parent=0 // pred_fallthru
    _

// kernel: _lambda_.6
$region0: #{_lambda_.6}
  #allocation0 [shape = 'u32[]', space=smem, size = 0x4, offset = 0x4, fixed_abs, tag = 'smem constant byte address 0x4 - core index']
  #allocation1 [shape = 'u32[144,128]{1,0:T(1,128)}', space=vmem, size = 0x12000, scoped, tag = 'internal scratch']
  %s0 = inlined_call_operand.vmem [shape: bf16[128,128], index: 0, kind: input, shape index: {}]
  %s1 = inlined_call_operand.vmem [shape: bf16[128,128], index: 1, kind: input, shape index: {}]
  %s2 = inlined_call_operand.vmem [shape: f32[1,128], index: 2, kind: input, shape index: {}]
  %s3 = inlined_call_operand.vmem [shape: bf16[128,128], index: 3, kind: output, shape index: {}]
  %s4 = sld [smem:[#allocation0]]
  $region22: #{_lambda_.6} parent=0
    _
  %s6 = ssub.s32 1, %s4
  %s7 = scalar_select 0, %s6, %s4
  // Predicated region
  $region2: #{_lambda_.6} parent=0 // pred_check
    _
  $region3: #{_lambda_.6} parent=0 // pred_check_branch
    %9 = sbr.rel (0) target = $region5
  $region4: #{_lambda_.6} parent=0 // pred_region
    _
  $region5: #{_lambda_.6} parent=0 // pred_fallthru
    _
  // Predicated region
  $region6: #{_lambda_.6} parent=0 // pred_check
    _
  $region7: #{_lambda_.6} parent=0 // pred_check_branch
    %11 = sbr.rel (0) target = $region9
  $region8: #{_lambda_.6} parent=0 // pred_region
    _
  $region9: #{_lambda_.6} parent=0 // pred_fallthru
    _
  // Predicated region
  $region10: #{_lambda_.6} parent=0 // pred_check
    _
  $region11: #{_lambda_.6} parent=0 // pred_check_branch
    %13 = sbr.rel (0) target = $region13
  $region12: #{_lambda_.6} parent=0 // pred_region
    _
  $region13: #{_lambda_.6} parent=0 // pred_fallthru
    _
  %v15 = vld [vmem:[%s0] sm:$0xf]
  %v16 = vld [vmem:[%s0 + $0x4] sm:$0xf]
  %v17 = vld [vmem:[%s0 + $0x8] sm:$0xf]
  %v18 = vld [vmem:[%s0 + $0xc] sm:$0xf]
  %v19 = vld [vmem:[%s0 + $0x10] sm:$0xf]
  %v20 = vld [vmem:[%s0 + $0x14] sm:$0xf]
  %v21 = vld [vmem:[%s0 + $0x18] sm:$0xf]
  %v22 = vld [vmem:[%s0 + $0x1c] sm:$0xf]
  %v23 = vld [vmem:[%s0 + $0x20] sm:$0xf]
  %v24 = vld [vmem:[%s0 + $0x24] sm:$0xf]
  %v25 = vld [vmem:[%s0 + $0x28] sm:$0xf]
  %v26 = vld [vmem:[%s0 + $0x2c] sm:$0xf]
  %v27 = vld [vmem:[%s0 + $0x30] sm:$0xf]
  %v28 = vld [vmem:[%s0 + $0x34] sm:$0xf]
  %v29 = vld [vmem:[%s0 + $0x38] sm:$0xf]
  %v30 = vld [vmem:[%s0 + $0x3c] sm:$0xf]
  %v31 = vld [vmem:[%s1] sm:$0xf]
  %v32 = vld [vmem:[%s1 + $0x4] sm:$0xf]
  %v33 = vld [vmem:[%s1 + $0x8] sm:$0xf]
  %v34 = vld [vmem:[%s1 + $0xc] sm:$0xf]
  %v35 = vld [vmem:[%s1 + $0x10] sm:$0xf]
  %v36 = vld [vmem:[%s1 + $0x14] sm:$0xf]
  %v37 = vld [vmem:[%s1 + $0x18] sm:$0xf]
  %v38 = vld [vmem:[%s1 + $0x1c] sm:$0xf]
  %v39 = vld [vmem:[%s1 + $0x20] sm:$0xf]
  %v40 = vld [vmem:[%s1 + $0x24] sm:$0xf]
  %v41 = vld [vmem:[%s1 + $0x28] sm:$0xf]
  %v42 = vld [vmem:[%s1 + $0x2c] sm:$0xf]
  %v43 = vld [vmem:[%s1 + $0x30] sm:$0xf]
  %v44 = vld [vmem:[%s1 + $0x34] sm:$0xf]
  %v45 = vld [vmem:[%s1 + $0x38] sm:$0xf]
  %v46 = vld [vmem:[%s1 + $0x3c] sm:$0xf]
  %v47 = vld [vmem:[%s2] sm:$0x1]
  %v49 = vlaneseq
  %v50 = vshrl.u32 %v49, 7
  %v51 = vsub.s32 0, %v50
  %v52 = vrot.slane %v47, %v51
  %v70 = vunpack.c.l.b16 %v15
  %v71 = vunpack.c.l.b16 %v16
  %v72 = vunpack.c.l.b16 %v17
  %v73 = vunpack.c.l.b16 %v18
  %v74 = vunpack.c.l.b16 %v19
  %v75 = vunpack.c.l.b16 %v20
  %v76 = vunpack.c.l.b16 %v21
  %v77 = vunpack.c.l.b16 %v22
  %v78 = vunpack.c.l.b16 %v23
  %v79 = vunpack.c.l.b16 %v24
  %v80 = vunpack.c.l.b16 %v25
  %v81 = vunpack.c.l.b16 %v26
  %v82 = vunpack.c.l.b16 %v27
  %v83 = vunpack.c.l.b16 %v28
  %v84 = vunpack.c.l.b16 %v29
  %v85 = vunpack.c.l.b16 %v30
  %v86 = vpack.c.b16 %v71, %v70
  %v87 = vpack.c.b16 %v73, %v72
  %v88 = vpack.c.b16 %v75, %v74
  %v89 = vpack.c.b16 %v77, %v76
  %v90 = vpack.c.b16 %v79, %v78
  %v91 = vpack.c.b16 %v81, %v80
  %v92 = vpack.c.b16 %v83, %v82
  %v93 = vpack.c.b16 %v85, %v84
  %v118 = vunpack.c.l.b16 %v31
  %v119 = vunpack.c.l.b16 %v32
  %v120 = vunpack.c.l.b16 %v33
  %v121 = vunpack.c.l.b16 %v34
  %v122 = vunpack.c.l.b16 %v35
  %v123 = vunpack.c.l.b16 %v36
  %v124 = vunpack.c.l.b16 %v37
  %v125 = vunpack.c.l.b16 %v38
  %v126 = vunpack.c.l.b16 %v39
  %v127 = vunpack.c.l.b16 %v40
  %v128 = vunpack.c.l.b16 %v41
  %v129 = vunpack.c.l.b16 %v42
  %v130 = vunpack.c.l.b16 %v43
  %v131 = vunpack.c.l.b16 %v44
  %v132 = vunpack.c.l.b16 %v45
  %v133 = vunpack.c.l.b16 %v46
  %v134 = vpack.c.b16 %v119, %v118
  %v135 = vpack.c.b16 %v121, %v120
  %v136 = vpack.c.b16 %v123, %v122
  %v137 = vpack.c.b16 %v125, %v124
  %v138 = vpack.c.b16 %v127, %v126
  %v139 = vpack.c.b16 %v129, %v128
  %v140 = vpack.c.b16 %v131, %v130
  %v141 = vpack.c.b16 %v133, %v132
  %150 = vmatprep.subr.bf16.mxu0 0
  %151 = vmatpush1.bf16.msra.mxu0 %v141
  %152 = vmatprep.subr.bf16.mxu0 0
  %153 = vmatpush1.bf16.msra.mxu0 %v140
  %154 = vmatprep.subr.bf16.mxu0 0
  %155 = vmatpush1.bf16.msra.mxu0 %v139
  %156 = vmatprep.subr.bf16.mxu0 0
  %157 = vmatpush1.bf16.msra.mxu0 %v138
  %158 = vmatprep.subr.bf16.mxu0 0
  %159 = vmatpush1.bf16.msra.mxu0 %v137
  %160 = vmatprep.subr.bf16.mxu0 0
  %161 = vmatpush1.bf16.msra.mxu0 %v136
  %162 = vmatprep.subr.bf16.mxu0 0
  %163 = vmatpush1.bf16.msra.mxu0 %v135
  %164 = vmatprep.subr.bf16.mxu0 0
  %165 = vmatpush1.bf16.msra.mxu0 %v134
  %166 = vmatprep.subr.bf16.mxu0 0
  %167 = vmatpush2.bf16.msra.mxu0 0
  %168 = vmatprep.subr.bf16.mxu0 0
  %169 = vmatpush2.bf16.msra.mxu0 0
  %170 = vmatprep.subr.bf16.mxu0 0
  %171 = vmatpush2.bf16.msra.mxu0 0
  %172 = vmatprep.subr.bf16.mxu0 0
  %173 = vmatpush2.bf16.msra.mxu0 0
  %174 = vmatprep.subr.bf16.mxu0 0
  %175 = vmatpush2.bf16.msra.mxu0 0
  %176 = vmatprep.subr.bf16.mxu0 0
  %177 = vmatpush2.bf16.msra.mxu0 0
  %178 = vmatprep.subr.bf16.mxu0 0
  %179 = vmatpush2.bf16.msra.mxu0 0
  %180 = vmatprep.subr.bf16.mxu0 0
  %181 = vmatpush2.bf16.msra.mxu0 0
  %182 = vmatprep.mubr.bf16.mxu0 0
  %183 = vmatmul.mubr.bf16.gmra.mxu0 %v86
  %v184 = vpop.f32.mrf.mxu0
  %v185 = vadd.f32 %v52, %v184
  %v186 = vpop.f32.mrf.mxu0
  %v187 = vpop.f32.mrf.mxu0
  %v188 = vadd.f32 %v52, %v187
  %v189 = vpop.f32.mrf.mxu0
  %190 = vmatprep.mubr.bf16.mxu0 0
  %191 = vmatmul.mubr.bf16.gmra.mxu0 %v87
  %v192 = vpop.f32.mrf.mxu0
  %v193 = vadd.f32 %v52, %v192
  %v194 = vpop.f32.mrf.mxu0
  %v195 = vpop.f32.mrf.mxu0
  %v196 = vadd.f32 %v52, %v195
  %v197 = vpop.f32.mrf.mxu0
  %198 = vmatprep.mubr.bf16.mxu0 0
  %199 = vmatmul.mubr.bf16.gmra.mxu0 %v88
  %v200 = vpop.f32.mrf.mxu0
  %v201 = vadd.f32 %v52, %v200
  %v202 = vpop.f32.mrf.mxu0
  %v203 = vpop.f32.mrf.mxu0
  %v204 = vadd.f32 %v52, %v203
  %v205 = vpop.f32.mrf.mxu0
  %206 = vmatprep.mubr.bf16.mxu0 0
  %207 = vmatmul.mubr.bf16.gmra.mxu0 %v89
  %v208 = vpop.f32.mrf.mxu0
  %v209 = vadd.f32 %v52, %v208
  %v210 = vpop.f32.mrf.mxu0
  %v211 = vpop.f32.mrf.mxu0
  %v212 = vadd.f32 %v52, %v211
  %v213 = vpop.f32.mrf.mxu0
  %214 = vmatprep.mubr.bf16.mxu0 0
  %215 = vmatmul.mubr.bf16.gmra.mxu0 %v90
  %v216 = vpop.f32.mrf.mxu0
  %v217 = vadd.f32 %v52, %v216
  %v218 = vpop.f32.mrf.mxu0
  %v219 = vpop.f32.mrf.mxu0
  %v220 = vadd.f32 %v52, %v219
  %v221 = vpop.f32.mrf.mxu0
  %222 = vmatprep.mubr.bf16.mxu0 0
  %223 = vmatmul.mubr.bf16.gmra.mxu0 %v91
  %v224 = vpop.f32.mrf.mxu0
  %v225 = vadd.f32 %v52, %v224
  %v226 = vpop.f32.mrf.mxu0
  %v227 = vpop.f32.mrf.mxu0
  %v228 = vadd.f32 %v52, %v227
  %v229 = vpop.f32.mrf.mxu0
  %230 = vmatprep.mubr.bf16.mxu0 0
  %231 = vmatmul.mubr.bf16.gmra.mxu0 %v92
  %v232 = vpop.f32.mrf.mxu0
  %v233 = vadd.f32 %v52, %v232
  %v234 = vpop.f32.mrf.mxu0
  %v235 = vpop.f32.mrf.mxu0
  %v236 = vadd.f32 %v52, %v235
  %v237 = vpop.f32.mrf.mxu0
  %238 = vmatprep.mubr.bf16.mxu0 0
  %239 = vmatmul.mubr.bf16.gmra.mxu0 %v93
  %v240 = vpop.f32.mrf.mxu0
  %v241 = vadd.f32 %v52, %v240
  %v242 = vpop.f32.mrf.mxu0
  %v243 = vpop.f32.mrf.mxu0
  %v244 = vadd.f32 %v52, %v243
  %v245 = vpop.f32.mrf.mxu0
  %246 = vdwg.mxu0
  %vm247 = vcmp.ge.f32.partialorder %v185, 0.0
  %vm248 = vcmp.ge.f32.partialorder %v188, 0.0
  %vm249 = vcmp.ge.f32.partialorder %v193, 0.0
  %vm250 = vcmp.ge.f32.partialorder %v196, 0.0
  %vm251 = vcmp.ge.f32.partialorder %v201, 0.0
  %vm252 = vcmp.ge.f32.partialorder %v204, 0.0
  %vm253 = vcmp.ge.f32.partialorder %v209, 0.0
  %vm254 = vcmp.ge.f32.partialorder %v212, 0.0
  %vm255 = vcmp.ge.f32.partialorder %v217, 0.0
  %vm256 = vcmp.ge.f32.partialorder %v220, 0.0
  %vm257 = vcmp.ge.f32.partialorder %v225, 0.0
  %vm258 = vcmp.ge.f32.partialorder %v228, 0.0
  %vm259 = vcmp.ge.f32.partialorder %v233, 0.0
  %vm260 = vcmp.ge.f32.partialorder %v236, 0.0
  %vm261 = vcmp.ge.f32.partialorder %v241, 0.0
  %vm262 = vcmp.ge.f32.partialorder %v244, 0.0
  %v263 = vmul.f32 %v185, 0.2
  %v264 = vmul.f32 %v188, 0.2
  %v265 = vmul.f32 %v193, 0.2
  %v266 = vmul.f32 %v196, 0.2
  %v267 = vmul.f32 %v201, 0.2
  %v268 = vmul.f32 %v204, 0.2
  %v269 = vmul.f32 %v209, 0.2
  %v270 = vmul.f32 %v212, 0.2
  %v271 = vmul.f32 %v217, 0.2
  %v272 = vmul.f32 %v220, 0.2
  %v273 = vmul.f32 %v225, 0.2
  %v274 = vmul.f32 %v228, 0.2
  %v275 = vmul.f32 %v233, 0.2
  %v276 = vmul.f32 %v236, 0.2
  %v277 = vmul.f32 %v241, 0.2
  %v278 = vmul.f32 %v244, 0.2
  %v279 = vsel %vm247, %v185, %v263
  %v280 = vsel %vm248, %v188, %v264
  %v281 = vsel %vm249, %v193, %v265
  %v282 = vsel %vm250, %v196, %v266
  %v283 = vsel %vm251, %v201, %v267
  %v284 = vsel %vm252, %v204, %v268
  %v285 = vsel %vm253, %v209, %v269
  %v286 = vsel %vm254, %v212, %v270
  %v287 = vsel %vm255, %v217, %v271
  %v288 = vsel %vm256, %v220, %v272
  %v289 = vsel %vm257, %v225, %v273
  %v290 = vsel %vm258, %v228, %v274
  %v291 = vsel %vm259, %v233, %v275
  %v292 = vsel %vm260, %v236, %v276
  %v293 = vsel %vm261, %v241, %v277
  %v294 = vsel %vm262, %v244, %v278
  %v295 = vpack.c.bf16 %v280, %v279
  %v296 = vpack.c.bf16 %v282, %v281
  %v297 = vpack.c.bf16 %v284, %v283
  %v298 = vpack.c.bf16 %v286, %v285
  %v299 = vpack.c.bf16 %v288, %v287
  %v300 = vpack.c.bf16 %v290, %v289
  %v301 = vpack.c.bf16 %v292, %v291
  %v302 = vpack.c.bf16 %v294, %v293
  %v311 = vunpack.c.l.b16 %v295
  %v312 = vunpack.c.h.b16 %v295
  %v313 = vunpack.c.l.b16 %v296
  %v314 = vunpack.c.h.b16 %v296
  %v315 = vunpack.c.l.b16 %v297
  %v316 = vunpack.c.h.b16 %v297
  %v317 = vunpack.c.l.b16 %v298
  %v318 = vunpack.c.h.b16 %v298
  %v319 = vunpack.c.l.b16 %v299
  %v320 = vunpack.c.h.b16 %v299
  %v321 = vunpack.c.l.b16 %v300
  %v322 = vunpack.c.h.b16 %v300
  %v323 = vunpack.c.l.b16 %v301
  %v324 = vunpack.c.h.b16 %v301
  %v325 = vunpack.c.l.b16 %v302
  %v326 = vunpack.c.h.b16 %v302
  %v327 = vpack.c.b16 %v311, %v311
  %v328 = vpack.c.b16 %v312, %v312
  %v329 = vpack.c.b16 %v313, %v313
  %v330 = vpack.c.b16 %v314, %v314
  %v331 = vpack.c.b16 %v315, %v315
  %v332 = vpack.c.b16 %v316, %v316
  %v333 = vpack.c.b16 %v317, %v317
  %v334 = vpack.c.b16 %v318, %v318
  %v335 = vpack.c.b16 %v319, %v319
  %v336 = vpack.c.b16 %v320, %v320
  %v337 = vpack.c.b16 %v321, %v321
  %v338 = vpack.c.b16 %v322, %v322
  %v339 = vpack.c.b16 %v323, %v323
  %v340 = vpack.c.b16 %v324, %v324
  %v341 = vpack.c.b16 %v325, %v325
  %v342 = vpack.c.b16 %v326, %v326
  %359 = vst [vmem:[%s3] sm:$0xf] %v327
  %360 = vst [vmem:[%s3 + $0x4] sm:$0xf] %v328
  %361 = vst [vmem:[%s3 + $0x8] sm:$0xf] %v329
  %362 = vst [vmem:[%s3 + $0xc] sm:$0xf] %v330
  %363 = vst [vmem:[%s3 + $0x10] sm:$0xf] %v331
  %364 = vst [vmem:[%s3 + $0x14] sm:$0xf] %v332
  %365 = vst [vmem:[%s3 + $0x18] sm:$0xf] %v333
  %366 = vst [vmem:[%s3 + $0x1c] sm:$0xf] %v334
  %367 = vst [vmem:[%s3 + $0x20] sm:$0xf] %v335
  %368 = vst [vmem:[%s3 + $0x24] sm:$0xf] %v336
  %369 = vst [vmem:[%s3 + $0x28] sm:$0xf] %v337
  %370 = vst [vmem:[%s3 + $0x2c] sm:$0xf] %v338
  %371 = vst [vmem:[%s3 + $0x30] sm:$0xf] %v339
  %372 = vst [vmem:[%s3 + $0x34] sm:$0xf] %v340
  %373 = vst [vmem:[%s3 + $0x38] sm:$0xf] %v341
  %374 = vst [vmem:[%s3 + $0x3c] sm:$0xf] %v342
  // Predicated region
  $region14: #{_lambda_.6} parent=0 // pred_check
    _
  $region15: #{_lambda_.6} parent=0 // pred_check_branch
    %376 = sbr.rel (0) target = $region17
  $region16: #{_lambda_.6} parent=0 // pred_region
    _
  $region17: #{_lambda_.6} parent=0 // pred_fallthru
    _
  // Predicated region
  $region18: #{_lambda_.6} parent=0 // pred_check
    _
  $region19: #{_lambda_.6} parent=0 // pred_check_branch
    %378 = sbr.rel (0) target = $region21
  $region20: #{_lambda_.6} parent=0 // pred_region
    _
  $region21: #{_lambda_.6} parent=0 // pred_fallthru
    _

// kernel: _lambda_.7
$region0: #{_lambda_.7}
  #allocation0 [shape = 'u32[]', space=smem, size = 0x4, offset = 0x4, fixed_abs, tag = 'smem constant byte address 0x4 - core index']
  #allocation1 [shape = 'u32[144,128]{1,0:T(1,128)}', space=vmem, size = 0x12000, scoped, tag = 'internal scratch']
  %s0 = inlined_call_operand.vmem [shape: bf16[32,256], index: 0, kind: input, shape index: {}]
  %s1 = inlined_call_operand.vmem [shape: bf16[256,128], index: 1, kind: input, shape index: {}]
  %s2 = inlined_call_operand.vmem [shape: f32[1,128], index: 2, kind: input, shape index: {}]
  %s3 = inlined_call_operand.vmem [shape: bf16[32,128], index: 3, kind: output, shape index: {}]
  %s4 = sld [smem:[#allocation0]]
  $region22: #{_lambda_.7} parent=0
    _
  %s6 = ssub.s32 1, %s4
  %s7 = scalar_select 0, %s6, %s4
  // Predicated region
  $region2: #{_lambda_.7} parent=0 // pred_check
    _
  $region3: #{_lambda_.7} parent=0 // pred_check_branch
    %9 = sbr.rel (0) target = $region5
  $region4: #{_lambda_.7} parent=0 // pred_region
    _
  $region5: #{_lambda_.7} parent=0 // pred_fallthru
    _
  // Predicated region
  $region6: #{_lambda_.7} parent=0 // pred_check
    _
  $region7: #{_lambda_.7} parent=0 // pred_check_branch
    %11 = sbr.rel (0) target = $region9
  $region8: #{_lambda_.7} parent=0 // pred_region
    _
  $region9: #{_lambda_.7} parent=0 // pred_fallthru
    _
  // Predicated region
  $region10: #{_lambda_.7} parent=0 // pred_check
    _
  $region11: #{_lambda_.7} parent=0 // pred_check_branch
    %13 = sbr.rel (0) target = $region13
  $region12: #{_lambda_.7} parent=0 // pred_region
    _
  $region13: #{_lambda_.7} parent=0 // pred_fallthru
    _
  %v15 = vld [vmem:[%s0] sm:$0xff]
  %v16 = vld [vmem:[%s0 + $0x8] sm:$0xff]
  %v17 = vld [vmem:[%s0 + $0x10] sm:$0xff]
  %v18 = vld [vmem:[%s0 + $0x18] sm:$0xff]
  %v19 = vld [vmem:[%s1] sm:$0xf]
  %v20 = vld [vmem:[%s1 + $0x4] sm:$0xf]
  %v21 = vld [vmem:[%s1 + $0x8] sm:$0xf]
  %v22 = vld [vmem:[%s1 + $0xc] sm:$0xf]
  %v23 = vld [vmem:[%s1 + $0x10] sm:$0xf]
  %v24 = vld [vmem:[%s1 + $0x14] sm:$0xf]
  %v25 = vld [vmem:[%s1 + $0x18] sm:$0xf]
  %v26 = vld [vmem:[%s1 + $0x1c] sm:$0xf]
  %v27 = vld [vmem:[%s1 + $0x20] sm:$0xf]
  %v28 = vld [vmem:[%s1 + $0x24] sm:$0xf]
  %v29 = vld [vmem:[%s1 + $0x28] sm:$0xf]
  %v30 = vld [vmem:[%s1 + $0x2c] sm:$0xf]
  %v31 = vld [vmem:[%s1 + $0x30] sm:$0xf]
  %v32 = vld [vmem:[%s1 + $0x34] sm:$0xf]
  %v33 = vld [vmem:[%s1 + $0x38] sm:$0xf]
  %v34 = vld [vmem:[%s1 + $0x3c] sm:$0xf]
  %v35 = vld [vmem:[%s1 + $0x40] sm:$0xf]
  %v36 = vld [vmem:[%s1 + $0x44] sm:$0xf]
  %v37 = vld [vmem:[%s1 + $0x48] sm:$0xf]
  %v38 = vld [vmem:[%s1 + $0x4c] sm:$0xf]
  %v39 = vld [vmem:[%s1 + $0x50] sm:$0xf]
  %v40 = vld [vmem:[%s1 + $0x54] sm:$0xf]
  %v41 = vld [vmem:[%s1 + $0x58] sm:$0xf]
  %v42 = vld [vmem:[%s1 + $0x5c] sm:$0xf]
  %v43 = vld [vmem:[%s1 + $0x60] sm:$0xf]
  %v44 = vld [vmem:[%s1 + $0x64] sm:$0xf]
  %v45 = vld [vmem:[%s1 + $0x68] sm:$0xf]
  %v46 = vld [vmem:[%s1 + $0x6c] sm:$0xf]
  %v47 = vld [vmem:[%s1 + $0x70] sm:$0xf]
  %v48 = vld [vmem:[%s1 + $0x74] sm:$0xf]
  %v49 = vld [vmem:[%s1 + $0x78] sm:$0xf]
  %v50 = vld [vmem:[%s1 + $0x7c] sm:$0xf]
  %v51 = vld [vmem:[%s2] sm:$0x1]
  %v53 = vlaneseq
  %v54 = vshrl.u32 %v53, 7
  %v55 = vsub.s32 0, %v54
  %v56 = vrot.slane %v51, %v55
  %v62 = vunpack.c.l.b16 %v15
  %v63 = vunpack.c.h.b16 %v15
  %v64 = vunpack.c.l.b16 %v16
  %v65 = vunpack.c.h.b16 %v16
  %v66 = vunpack.c.l.b16 %v17
  %v67 = vunpack.c.h.b16 %v17
  %v68 = vunpack.c.l.b16 %v18
  %v69 = vunpack.c.h.b16 %v18
  %v70 = vpack.c.b16 %v64, %v62
  %v71 = vpack.c.b16 %v65, %v63
  %v72 = vpack.c.b16 %v68, %v66
  %v73 = vpack.c.b16 %v69, %v67
  %v110 = vunpack.c.l.b16 %v19
  %v111 = vunpack.c.l.b16 %v20
  %v112 = vunpack.c.l.b16 %v21
  %v113 = vunpack.c.l.b16 %v22
  %v114 = vunpack.c.l.b16 %v23
  %v115 = vunpack.c.l.b16 %v24
  %v116 = vunpack.c.l.b16 %v25
  %v117 = vunpack.c.l.b16 %v26
  %v118 = vunpack.c.l.b16 %v27
  %v119 = vunpack.c.l.b16 %v28
  %v120 = vunpack.c.l.b16 %v29
  %v121 = vunpack.c.l.b16 %v30
  %v122 = vunpack.c.l.b16 %v31
  %v123 = vunpack.c.l.b16 %v32
  %v124 = vunpack.c.l.b16 %v33
  %v125 = vunpack.c.l.b16 %v34
  %v126 = vunpack.c.l.b16 %v35
  %v127 = vunpack.c.l.b16 %v36
  %v128 = vunpack.c.l.b16 %v37
  %v129 = vunpack.c.l.b16 %v38
  %v130 = vunpack.c.l.b16 %v39
  %v131 = vunpack.c.l.b16 %v40
  %v132 = vunpack.c.l.b16 %v41
  %v133 = vunpack.c.l.b16 %v42
  %v134 = vunpack.c.l.b16 %v43
  %v135 = vunpack.c.l.b16 %v44
  %v136 = vunpack.c.l.b16 %v45
  %v137 = vunpack.c.l.b16 %v46
  %v138 = vunpack.c.l.b16 %v47
  %v139 = vunpack.c.l.b16 %v48
  %v140 = vunpack.c.l.b16 %v49
  %v141 = vunpack.c.l.b16 %v50
  %v142 = vpack.c.b16 %v111, %v110
  %v143 = vpack.c.b16 %v113, %v112
  %v144 = vpack.c.b16 %v115, %v114
  %v145 = vpack.c.b16 %v117, %v116
  %v146 = vpack.c.b16 %v119, %v118
  %v147 = vpack.c.b16 %v121, %v120
  %v148 = vpack.c.b16 %v123, %v122
  %v149 = vpack.c.b16 %v125, %v124
  %v150 = vpack.c.b16 %v127, %v126
  %v151 = vpack.c.b16 %v129, %v128
  %v152 = vpack.c.b16 %v131, %v130
  %v153 = vpack.c.b16 %v133, %v132
  %v154 = vpack.c.b16 %v135, %v134
  %v155 = vpack.c.b16 %v137, %v136
  %v156 = vpack.c.b16 %v139, %v138
  %v157 = vpack.c.b16 %v141, %v140
  %174 = vmatprep.subr.bf16.mxu0 0
  %175 = vmatpush1.bf16.msra.mxu0 %v149
  %176 = vmatprep.subr.bf16.mxu0 0
  %177 = vmatpush1.bf16.msra.mxu0 %v148
  %178 = vmatprep.subr.bf16.mxu0 0
  %179 = vmatpush1.bf16.msra.mxu0 %v147
  %180 = vmatprep.subr.bf16.mxu0 0
  %181 = vmatpush1.bf16.msra.mxu0 %v146
  %182 = vmatprep.subr.bf16.mxu0 0
  %183 = vmatpush1.bf16.msra.mxu0 %v145
  %184 = vmatprep.subr.bf16.mxu0 0
  %185 = vmatpush1.bf16.msra.mxu0 %v144
  %186 = vmatprep.subr.bf16.mxu0 0
  %187 = vmatpush1.bf16.msra.mxu0 %v143
  %188 = vmatprep.subr.bf16.mxu0 0
  %189 = vmatpush1.bf16.msra.mxu0 %v142
  %190 = vmatprep.subr.bf16.mxu0 0
  %191 = vmatpush2.bf16.msra.mxu0 %v157
  %192 = vmatprep.subr.bf16.mxu0 0
  %193 = vmatpush2.bf16.msra.mxu0 %v156
  %194 = vmatprep.subr.bf16.mxu0 0
  %195 = vmatpush2.bf16.msra.mxu0 %v155
  %196 = vmatprep.subr.bf16.mxu0 0
  %197 = vmatpush2.bf16.msra.mxu0 %v154
  %198 = vmatprep.subr.bf16.mxu0 0
  %199 = vmatpush2.bf16.msra.mxu0 %v153
  %200 = vmatprep.subr.bf16.mxu0 0
  %201 = vmatpush2.bf16.msra.mxu0 %v152
  %202 = vmatprep.subr.bf16.mxu0 0
  %203 = vmatpush2.bf16.msra.mxu0 %v151
  %204 = vmatprep.subr.bf16.mxu0 0
  %205 = vmatpush2.bf16.msra.mxu0 %v150
  %206 = vmatprep.mubr.bf16.mxu0 %v71
  %207 = vmatmul.mubr.bf16.gmra.mxu0 %v70
  %v208 = vpop.f32.mrf.mxu0
  %v209 = vadd.f32 %v56, %v208
  %v210 = vpop.f32.mrf.mxu0
  %v211 = vpop.f32.mrf.mxu0
  %v212 = vadd.f32 %v56, %v211
  %v213 = vpop.f32.mrf.mxu0
  %214 = vmatprep.mubr.bf16.mxu0 %v73
  %215 = vmatmul.mubr.bf16.gmra.mxu0 %v72
  %v216 = vpop.f32.mrf.mxu0
  %v217 = vadd.f32 %v56, %v216
  %v218 = vpop.f32.mrf.mxu0
  %v219 = vpop.f32.mrf.mxu0
  %v220 = vadd.f32 %v56, %v219
  %v221 = vpop.f32.mrf.mxu0
  %222 = vdwg.mxu0
  %vm223 = vcmp.ge.f32.partialorder %v209, 0.0
  %vm224 = vcmp.ge.f32.partialorder %v212, 0.0
  %vm225 = vcmp.ge.f32.partialorder %v217, 0.0
  %vm226 = vcmp.ge.f32.partialorder %v220, 0.0
  %v227 = vmul.f32 %v209, 0.2
  %v228 = vmul.f32 %v212, 0.2
  %v229 = vmul.f32 %v217, 0.2
  %v230 = vmul.f32 %v220, 0.2
  %v231 = vsel %vm223, %v209, %v227
  %v232 = vsel %vm224, %v212, %v228
  %v233 = vsel %vm225, %v217, %v229
  %v234 = vsel %vm226, %v220, %v230
  %v235 = vpack.c.bf16 %v232, %v231
  %v236 = vpack.c.bf16 %v234, %v233
  %v239 = vunpack.c.l.b16 %v235
  %v240 = vunpack.c.h.b16 %v235
  %v241 = vunpack.c.l.b16 %v236
  %v242 = vunpack.c.h.b16 %v236
  %v243 = vpack.c.b16 %v239, %v239
  %v244 = vpack.c.b16 %v240, %v240
  %v245 = vpack.c.b16 %v241, %v241
  %v246 = vpack.c.b16 %v242, %v242
  %251 = vst [vmem:[%s3] sm:$0xf] %v243
  %252 = vst [vmem:[%s3 + $0x4] sm:$0xf] %v244
  %253 = vst [vmem:[%s3 + $0x8] sm:$0xf] %v245
  %254 = vst [vmem:[%s3 + $0xc] sm:$0xf] %v246
  // Predicated region
  $region14: #{_lambda_.7} parent=0 // pred_check
    _
  $region15: #{_lambda_.7} parent=0 // pred_check_branch
    %256 = sbr.rel (0) target = $region17
  $region16: #{_lambda_.7} parent=0 // pred_region
    _
  $region17: #{_lambda_.7} parent=0 // pred_fallthru
    _
  // Predicated region
  $region18: #{_lambda_.7} parent=0 // pred_check
    _
  $region19: #{_lambda_.7} parent=0 // pred_check_branch
    %258 = sbr.rel (0) target = $region21
  $region20: #{_lambda_.7} parent=0 // pred_region
    _
  $region21: #{_lambda_.7} parent=0 // pred_fallthru
    _

// kernel: _lambda_.8
$region0: #{_lambda_.8}
  #allocation0 [shape = 'u32[]', space=smem, size = 0x4, offset = 0x4, fixed_abs, tag = 'smem constant byte address 0x4 - core index']
  #allocation1 [shape = 'u32[144,128]{1,0:T(1,128)}', space=vmem, size = 0x12000, scoped, tag = 'internal scratch']
  %s0 = inlined_call_operand.vmem [shape: bf16[32,512], index: 0, kind: input, shape index: {}]
  %s1 = inlined_call_operand.vmem [shape: bf16[512,128], index: 1, kind: input, shape index: {}]
  %s2 = inlined_call_operand.vmem [shape: f32[1,128], index: 2, kind: input, shape index: {}]
  %s3 = inlined_call_operand.vmem [shape: bf16[32,128], index: 3, kind: output, shape index: {}]
  %s4 = sld [smem:[#allocation0]]
  $region22: #{_lambda_.8} parent=0
    _
  %s6 = ssub.s32 1, %s4
  %s7 = scalar_select 0, %s6, %s4
  // Predicated region
  $region2: #{_lambda_.8} parent=0 // pred_check
    _
  $region3: #{_lambda_.8} parent=0 // pred_check_branch
    %9 = sbr.rel (0) target = $region5
  $region4: #{_lambda_.8} parent=0 // pred_region
    _
  $region5: #{_lambda_.8} parent=0 // pred_fallthru
    _
  // Predicated region
  $region6: #{_lambda_.8} parent=0 // pred_check
    _
  $region7: #{_lambda_.8} parent=0 // pred_check_branch
    %11 = sbr.rel (0) target = $region9
  $region8: #{_lambda_.8} parent=0 // pred_region
    _
  $region9: #{_lambda_.8} parent=0 // pred_fallthru
    _
  // Predicated region
  $region10: #{_lambda_.8} parent=0 // pred_check
    _
  $region11: #{_lambda_.8} parent=0 // pred_check_branch
    %13 = sbr.rel (0) target = $region13
  $region12: #{_lambda_.8} parent=0 // pred_region
    _
  $region13: #{_lambda_.8} parent=0 // pred_fallthru
    _
  %v15 = vld [vmem:[%s0] sm:$0xff]
  %v16 = vld [vmem:[%s0 + $0x8] sm:$0xff]
  %v17 = vld [vmem:[%s0 + $0x10] sm:$0xff]
  %v18 = vld [vmem:[%s0 + $0x18] sm:$0xff]
  %v19 = vld [vmem:[%s0 + $0x20] sm:$0xff]
  %v20 = vld [vmem:[%s0 + $0x28] sm:$0xff]
  %v21 = vld [vmem:[%s0 + $0x30] sm:$0xff]
  %v22 = vld [vmem:[%s0 + $0x38] sm:$0xff]
  %v23 = vld [vmem:[%s1] sm:$0xf]
  %v24 = vld [vmem:[%s1 + $0x4] sm:$0xf]
  %v25 = vld [vmem:[%s1 + $0x8] sm:$0xf]
  %v26 = vld [vmem:[%s1 + $0xc] sm:$0xf]
  %v27 = vld [vmem:[%s1 + $0x10] sm:$0xf]
  %v28 = vld [vmem:[%s1 + $0x14] sm:$0xf]
  %v29 = vld [vmem:[%s1 + $0x18] sm:$0xf]
  %v30 = vld [vmem:[%s1 + $0x1c] sm:$0xf]
  %v31 = vld [vmem:[%s1 + $0x20] sm:$0xf]
  %v32 = vld [vmem:[%s1 + $0x24] sm:$0xf]
  %v33 = vld [vmem:[%s1 + $0x28] sm:$0xf]
  %v34 = vld [vmem:[%s1 + $0x2c] sm:$0xf]
  %v35 = vld [vmem:[%s1 + $0x30] sm:$0xf]
  %v36 = vld [vmem:[%s1 + $0x34] sm:$0xf]
  %v37 = vld [vmem:[%s1 + $0x38] sm:$0xf]
  %v38 = vld [vmem:[%s1 + $0x3c] sm:$0xf]
  %v39 = vld [vmem:[%s1 + $0x40] sm:$0xf]
  %v40 = vld [vmem:[%s1 + $0x44] sm:$0xf]
  %v41 = vld [vmem:[%s1 + $0x48] sm:$0xf]
  %v42 = vld [vmem:[%s1 + $0x4c] sm:$0xf]
  %v43 = vld [vmem:[%s1 + $0x50] sm:$0xf]
  %v44 = vld [vmem:[%s1 + $0x54] sm:$0xf]
  %v45 = vld [vmem:[%s1 + $0x58] sm:$0xf]
  %v46 = vld [vmem:[%s1 + $0x5c] sm:$0xf]
  %v47 = vld [vmem:[%s1 + $0x60] sm:$0xf]
  %v48 = vld [vmem:[%s1 + $0x64] sm:$0xf]
  %v49 = vld [vmem:[%s1 + $0x68] sm:$0xf]
  %v50 = vld [vmem:[%s1 + $0x6c] sm:$0xf]
  %v51 = vld [vmem:[%s1 + $0x70] sm:$0xf]
  %v52 = vld [vmem:[%s1 + $0x74] sm:$0xf]
  %v53 = vld [vmem:[%s1 + $0x78] sm:$0xf]
  %v54 = vld [vmem:[%s1 + $0x7c] sm:$0xf]
  %v55 = vld [vmem:[%s1 + $0x80] sm:$0xf]
  %v56 = vld [vmem:[%s1 + $0x84] sm:$0xf]
  %v57 = vld [vmem:[%s1 + $0x88] sm:$0xf]
  %v58 = vld [vmem:[%s1 + $0x8c] sm:$0xf]
  %v59 = vld [vmem:[%s1 + $0x90] sm:$0xf]
  %v60 = vld [vmem:[%s1 + $0x94] sm:$0xf]
  %v61 = vld [vmem:[%s1 + $0x98] sm:$0xf]
  %v62 = vld [vmem:[%s1 + $0x9c] sm:$0xf]
  %v63 = vld [vmem:[%s1 + $0xa0] sm:$0xf]
  %v64 = vld [vmem:[%s1 + $0xa4] sm:$0xf]
  %v65 = vld [vmem:[%s1 + $0xa8] sm:$0xf]
  %v66 = vld [vmem:[%s1 + $0xac] sm:$0xf]
  %v67 = vld [vmem:[%s1 + $0xb0] sm:$0xf]
  %v68 = vld [vmem:[%s1 + $0xb4] sm:$0xf]
  %v69 = vld [vmem:[%s1 + $0xb8] sm:$0xf]
  %v70 = vld [vmem:[%s1 + $0xbc] sm:$0xf]
  %v71 = vld [vmem:[%s1 + $0xc0] sm:$0xf]
  %v72 = vld [vmem:[%s1 + $0xc4] sm:$0xf]
  %v73 = vld [vmem:[%s1 + $0xc8] sm:$0xf]
  %v74 = vld [vmem:[%s1 + $0xcc] sm:$0xf]
  %v75 = vld [vmem:[%s1 + $0xd0] sm:$0xf]
  %v76 = vld [vmem:[%s1 + $0xd4] sm:$0xf]
  %v77 = vld [vmem:[%s1 + $0xd8] sm:$0xf]
  %v78 = vld [vmem:[%s1 + $0xdc] sm:$0xf]
  %v79 = vld [vmem:[%s1 + $0xe0] sm:$0xf]
  %v80 = vld [vmem:[%s1 + $0xe4] sm:$0xf]
  %v81 = vld [vmem:[%s1 + $0xe8] sm:$0xf]
  %v82 = vld [vmem:[%s1 + $0xec] sm:$0xf]
  %v83 = vld [vmem:[%s1 + $0xf0] sm:$0xf]
  %v84 = vld [vmem:[%s1 + $0xf4] sm:$0xf]
  %v85 = vld [vmem:[%s1 + $0xf8] sm:$0xf]
  %v86 = vld [vmem:[%s1 + $0xfc] sm:$0xf]
  %v87 = vld [vmem:[%s2] sm:$0x1]
  %v89 = vlaneseq
  %v90 = vshrl.u32 %v89, 7
  %v91 = vsub.s32 0, %v90
  %v92 = vrot.slane %v87, %v91
  %v102 = vunpack.c.l.b16 %v15
  %v103 = vunpack.c.h.b16 %v15
  %v104 = vunpack.c.l.b16 %v16
  %v105 = vunpack.c.h.b16 %v16
  %v106 = vunpack.c.l.b16 %v17
  %v107 = vunpack.c.h.b16 %v17
  %v108 = vunpack.c.l.b16 %v18
  %v109 = vunpack.c.h.b16 %v18
  %v110 = vunpack.c.l.b16 %v19
  %v111 = vunpack.c.h.b16 %v19
  %v112 = vunpack.c.l.b16 %v20
  %v113 = vunpack.c.h.b16 %v20
  %v114 = vunpack.c.l.b16 %v21
  %v115 = vunpack.c.h.b16 %v21
  %v116 = vunpack.c.l.b16 %v22
  %v117 = vunpack.c.h.b16 %v22
  %v118 = vpack.c.b16 %v106, %v102
  %v119 = vpack.c.b16 %v107, %v103
  %v120 = vpack.c.b16 %v108, %v104
  %v121 = vpack.c.b16 %v109, %v105
  %v122 = vpack.c.b16 %v114, %v110
  %v123 = vpack.c.b16 %v115, %v111
  %v124 = vpack.c.b16 %v116, %v112
  %v125 = vpack.c.b16 %v117, %v113
  %v198 = vunpack.c.l.b16 %v23
  %v199 = vunpack.c.l.b16 %v24
  %v200 = vunpack.c.l.b16 %v25
  %v201 = vunpack.c.l.b16 %v26
  %v202 = vunpack.c.l.b16 %v27
  %v203 = vunpack.c.l.b16 %v28
  %v204 = vunpack.c.l.b16 %v29
  %v205 = vunpack.c.l.b16 %v30
  %v206 = vunpack.c.l.b16 %v31
  %v207 = vunpack.c.l.b16 %v32
  %v208 = vunpack.c.l.b16 %v33
  %v209 = vunpack.c.l.b16 %v34
  %v210 = vunpack.c.l.b16 %v35
  %v211 = vunpack.c.l.b16 %v36
  %v212 = vunpack.c.l.b16 %v37
  %v213 = vunpack.c.l.b16 %v38
  %v214 = vunpack.c.l.b16 %v39
  %v215 = vunpack.c.l.b16 %v40
  %v216 = vunpack.c.l.b16 %v41
  %v217 = vunpack.c.l.b16 %v42
  %v218 = vunpack.c.l.b16 %v43
  %v219 = vunpack.c.l.b16 %v44
  %v220 = vunpack.c.l.b16 %v45
  %v221 = vunpack.c.l.b16 %v46
  %v222 = vunpack.c.l.b16 %v47
  %v223 = vunpack.c.l.b16 %v48
  %v224 = vunpack.c.l.b16 %v49
  %v225 = vunpack.c.l.b16 %v50
  %v226 = vunpack.c.l.b16 %v51
  %v227 = vunpack.c.l.b16 %v52
  %v228 = vunpack.c.l.b16 %v53
  %v229 = vunpack.c.l.b16 %v54
  %v230 = vunpack.c.l.b16 %v55
  %v231 = vunpack.c.l.b16 %v56
  %v232 = vunpack.c.l.b16 %v57
  %v233 = vunpack.c.l.b16 %v58
  %v234 = vunpack.c.l.b16 %v59
  %v235 = vunpack.c.l.b16 %v60
  %v236 = vunpack.c.l.b16 %v61
  %v237 = vunpack.c.l.b16 %v62
  %v238 = vunpack.c.l.b16 %v63
  %v239 = vunpack.c.l.b16 %v64
  %v240 = vunpack.c.l.b16 %v65
  %v241 = vunpack.c.l.b16 %v66
  %v242 = vunpack.c.l.b16 %v67
  %v243 = vunpack.c.l.b16 %v68
  %v244 = vunpack.c.l.b16 %v69
  %v245 = vunpack.c.l.b16 %v70
  %v246 = vunpack.c.l.b16 %v71
  %v247 = vunpack.c.l.b16 %v72
  %v248 = vunpack.c.l.b16 %v73
  %v249 = vunpack.c.l.b16 %v74
  %v250 = vunpack.c.l.b16 %v75
  %v251 = vunpack.c.l.b16 %v76
  %v252 = vunpack.c.l.b16 %v77
  %v253 = vunpack.c.l.b16 %v78
  %v254 = vunpack.c.l.b16 %v79
  %v255 = vunpack.c.l.b16 %v80
  %v256 = vunpack.c.l.b16 %v81
  %v257 = vunpack.c.l.b16 %v82
  %v258 = vunpack.c.l.b16 %v83
  %v259 = vunpack.c.l.b16 %v84
  %v260 = vunpack.c.l.b16 %v85
  %v261 = vunpack.c.l.b16 %v86
  %v262 = vpack.c.b16 %v199, %v198
  %v263 = vpack.c.b16 %v201, %v200
  %v264 = vpack.c.b16 %v203, %v202
  %v265 = vpack.c.b16 %v205, %v204
  %v266 = vpack.c.b16 %v207, %v206
  %v267 = vpack.c.b16 %v209, %v208
  %v268 = vpack.c.b16 %v211, %v210
  %v269 = vpack.c.b16 %v213, %v212
  %v270 = vpack.c.b16 %v215, %v214
  %v271 = vpack.c.b16 %v217, %v216
  %v272 = vpack.c.b16 %v219, %v218
  %v273 = vpack.c.b16 %v221, %v220
  %v274 = vpack.c.b16 %v223, %v222
  %v275 = vpack.c.b16 %v225, %v224
  %v276 = vpack.c.b16 %v227, %v226
  %v277 = vpack.c.b16 %v229, %v228
  %v278 = vpack.c.b16 %v231, %v230
  %v279 = vpack.c.b16 %v233, %v232
  %v280 = vpack.c.b16 %v235, %v234
  %v281 = vpack.c.b16 %v237, %v236
  %v282 = vpack.c.b16 %v239, %v238
  %v283 = vpack.c.b16 %v241, %v240
  %v284 = vpack.c.b16 %v243, %v242
  %v285 = vpack.c.b16 %v245, %v244
  %v286 = vpack.c.b16 %v247, %v246
  %v287 = vpack.c.b16 %v249, %v248
  %v288 = vpack.c.b16 %v251, %v250
  %v289 = vpack.c.b16 %v253, %v252
  %v290 = vpack.c.b16 %v255, %v254
  %v291 = vpack.c.b16 %v257, %v256
  %v292 = vpack.c.b16 %v259, %v258
  %v293 = vpack.c.b16 %v261, %v260
  %326 = vmatprep.subr.bf16.mxu0 0
  %327 = vmatpush1.bf16.msra.mxu0 %v269
  %328 = vmatprep.subr.bf16.mxu0 0
  %329 = vmatpush1.bf16.msra.mxu0 %v268
  %330 = vmatprep.subr.bf16.mxu0 0
  %331 = vmatpush1.bf16.msra.mxu0 %v267
  %332 = vmatprep.subr.bf16.mxu0 0
  %333 = vmatpush1.bf16.msra.mxu0 %v266
  %334 = vmatprep.subr.bf16.mxu0 0
  %335 = vmatpush1.bf16.msra.mxu0 %v265
  %336 = vmatprep.subr.bf16.mxu0 0
  %337 = vmatpush1.bf16.msra.mxu0 %v264
  %338 = vmatprep.subr.bf16.mxu0 0
  %339 = vmatpush1.bf16.msra.mxu0 %v263
  %340 = vmatprep.subr.bf16.mxu0 0
  %341 = vmatpush1.bf16.msra.mxu0 %v262
  %342 = vmatprep.subr.bf16.mxu0 0
  %343 = vmatpush2.bf16.msra.mxu0 %v277
  %344 = vmatprep.subr.bf16.mxu0 0
  %345 = vmatpush2.bf16.msra.mxu0 %v276
  %346 = vmatprep.subr.bf16.mxu0 0
  %347 = vmatpush2.bf16.msra.mxu0 %v275
  %348 = vmatprep.subr.bf16.mxu0 0
  %349 = vmatpush2.bf16.msra.mxu0 %v274
  %350 = vmatprep.subr.bf16.mxu0 0
  %351 = vmatpush2.bf16.msra.mxu0 %v273
  %352 = vmatprep.subr.bf16.mxu0 0
  %353 = vmatpush2.bf16.msra.mxu0 %v272
  %354 = vmatprep.subr.bf16.mxu0 0
  %355 = vmatpush2.bf16.msra.mxu0 %v271
  %356 = vmatprep.subr.bf16.mxu0 0
  %357 = vmatpush2.bf16.msra.mxu0 %v270
  %358 = vmatprep.mubr.bf16.mxu0 %v119
  %359 = vmatmul.mubr.bf16.gmra.mxu0 %v118
  %v360 = vpop.f32.mrf.mxu0
  %v361 = vadd.f32 %v92, %v360
  %v362 = vpop.f32.mrf.mxu0
  %v363 = vpop.f32.mrf.mxu0
  %v364 = vadd.f32 %v92, %v363
  %v365 = vpop.f32.mrf.mxu0
  %366 = vmatprep.mubr.bf16.mxu0 %v123
  %367 = vmatmul.mubr.bf16.gmra.mxu0 %v122
  %v368 = vpop.f32.mrf.mxu0
  %v369 = vadd.f32 %v92, %v368
  %v370 = vpop.f32.mrf.mxu0
  %v371 = vpop.f32.mrf.mxu0
  %v372 = vadd.f32 %v92, %v371
  %v373 = vpop.f32.mrf.mxu0
  %374 = vdwg.mxu0
  %375 = vmatprep.subr.bf16.mxu0 0
  %376 = vmatpush1.bf16.msra.mxu0 %v285
  %377 = vmatprep.subr.bf16.mxu0 0
  %378 = vmatpush1.bf16.msra.mxu0 %v284
  %379 = vmatprep.subr.bf16.mxu0 0
  %380 = vmatpush1.bf16.msra.mxu0 %v283
  %381 = vmatprep.subr.bf16.mxu0 0
  %382 = vmatpush1.bf16.msra.mxu0 %v282
  %383 = vmatprep.subr.bf16.mxu0 0
  %384 = vmatpush1.bf16.msra.mxu0 %v281
  %385 = vmatprep.subr.bf16.mxu0 0
  %386 = vmatpush1.bf16.msra.mxu0 %v280
  %387 = vmatprep.subr.bf16.mxu0 0
  %388 = vmatpush1.bf16.msra.mxu0 %v279
  %389 = vmatprep.subr.bf16.mxu0 0
  %390 = vmatpush1.bf16.msra.mxu0 %v278
  %391 = vmatprep.subr.bf16.mxu0 0
  %392 = vmatpush2.bf16.msra.mxu0 %v293
  %393 = vmatprep.subr.bf16.mxu0 0
  %394 = vmatpush2.bf16.msra.mxu0 %v292
  %395 = vmatprep.subr.bf16.mxu0 0
  %396 = vmatpush2.bf16.msra.mxu0 %v291
  %397 = vmatprep.subr.bf16.mxu0 0
  %398 = vmatpush2.bf16.msra.mxu0 %v290
  %399 = vmatprep.subr.bf16.mxu0 0
  %400 = vmatpush2.bf16.msra.mxu0 %v289
  %401 = vmatprep.subr.bf16.mxu0 0
  %402 = vmatpush2.bf16.msra.mxu0 %v288
  %403 = vmatprep.subr.bf16.mxu0 0
  %404 = vmatpush2.bf16.msra.mxu0 %v287
  %405 = vmatprep.subr.bf16.mxu0 0
  %406 = vmatpush2.bf16.msra.mxu0 %v286
  %407 = vmatprep.mubr.bf16.mxu0 %v121
  %408 = vmatmul.mubr.bf16.gmra.mxu0 %v120
  %v409 = vpop.f32.mrf.mxu0
  %v410 = vadd.f32 %v361, %v409
  %v411 = vpop.f32.mrf.mxu0
  %v412 = vpop.f32.mrf.mxu0
  %v413 = vadd.f32 %v364, %v412
  %v414 = vpop.f32.mrf.mxu0
  %415 = vmatprep.mubr.bf16.mxu0 %v125
  %416 = vmatmul.mubr.bf16.gmra.mxu0 %v124
  %v417 = vpop.f32.mrf.mxu0
  %v418 = vadd.f32 %v369, %v417
  %v419 = vpop.f32.mrf.mxu0
  %v420 = vpop.f32.mrf.mxu0
  %v421 = vadd.f32 %v372, %v420
  %v422 = vpop.f32.mrf.mxu0
  %423 = vdwg.mxu0
  %vm424 = vcmp.ge.f32.partialorder %v410, 0.0
  %vm425 = vcmp.ge.f32.partialorder %v413, 0.0
  %vm426 = vcmp.ge.f32.partialorder %v418, 0.0
  %vm427 = vcmp.ge.f32.partialorder %v421, 0.0
  %v428 = vmul.f32 %v410, 0.2
  %v429 = vmul.f32 %v413, 0.2
  %v430 = vmul.f32 %v418, 0.2
  %v431 = vmul.f32 %v421, 0.2
  %v432 = vsel %vm424, %v410, %v428
  %v433 = vsel %vm425, %v413, %v429
  %v434 = vsel %vm426, %v418, %v430
  %v435 = vsel %vm427, %v421, %v431
  %v436 = vpack.c.bf16 %v433, %v432
  %v437 = vpack.c.bf16 %v435, %v434
  %v440 = vunpack.c.l.b16 %v436
  %v441 = vunpack.c.h.b16 %v436
  %v442 = vunpack.c.l.b16 %v437
  %v443 = vunpack.c.h.b16 %v437
  %v444 = vpack.c.b16 %v440, %v440
  %v445 = vpack.c.b16 %v441, %v441
  %v446 = vpack.c.b16 %v442, %v442
  %v447 = vpack.c.b16 %v443, %v443
  %452 = vst [vmem:[%s3] sm:$0xf] %v444
  %453 = vst [vmem:[%s3 + $0x4] sm:$0xf] %v445
  %454 = vst [vmem:[%s3 + $0x8] sm:$0xf] %v446
  %455 = vst [vmem:[%s3 + $0xc] sm:$0xf] %v447
  // Predicated region
  $region14: #{_lambda_.8} parent=0 // pred_check
    _
  $region15: #{_lambda_.8} parent=0 // pred_check_branch
    %457 = sbr.rel (0) target = $region17
  $region16: #{_lambda_.8} parent=0 // pred_region
    _
  $region17: #{_lambda_.8} parent=0 // pred_fallthru
    _
  // Predicated region
  $region18: #{_lambda_.8} parent=0 // pred_check
    _
  $region19: #{_lambda_.8} parent=0 // pred_check_branch
    %459 = sbr.rel (0) target = $region21
  $region20: #{_lambda_.8} parent=0 // pred_region
    _
  $region21: #{_lambda_.8} parent=0 // pred_fallthru
    _

// kernel: _lambda_.9
$region0: #{_lambda_.9}
  #allocation0 [shape = 'u32[]', space=smem, size = 0x4, offset = 0x4, fixed_abs, tag = 'smem constant byte address 0x4 - core index']
  #allocation1 [shape = 'u32[144,128]{1,0:T(1,128)}', space=vmem, size = 0x12000, scoped, tag = 'internal scratch']
  %s0 = inlined_call_operand.vmem [shape: bf16[16,1024], index: 0, kind: input, shape index: {}]
  %s1 = inlined_call_operand.vmem [shape: bf16[1024,128], index: 1, kind: input, shape index: {}]
  %s2 = inlined_call_operand.vmem [shape: f32[1,128], index: 2, kind: input, shape index: {}]
  %s3 = inlined_call_operand.vmem [shape: f32[16,128], index: 3, kind: output, shape index: {}]
  %s4 = sld [smem:[#allocation0]]
  $region22: #{_lambda_.9} parent=0
    _
  %s6 = ssub.s32 1, %s4
  %s7 = scalar_select 0, %s6, %s4
  // Predicated region
  $region2: #{_lambda_.9} parent=0 // pred_check
    _
  $region3: #{_lambda_.9} parent=0 // pred_check_branch
    %9 = sbr.rel (0) target = $region5
  $region4: #{_lambda_.9} parent=0 // pred_region
    _
  $region5: #{_lambda_.9} parent=0 // pred_fallthru
    _
  // Predicated region
  $region6: #{_lambda_.9} parent=0 // pred_check
    _
  $region7: #{_lambda_.9} parent=0 // pred_check_branch
    %11 = sbr.rel (0) target = $region9
  $region8: #{_lambda_.9} parent=0 // pred_region
    _
  $region9: #{_lambda_.9} parent=0 // pred_fallthru
    _
  // Predicated region
  $region10: #{_lambda_.9} parent=0 // pred_check
    _
  $region11: #{_lambda_.9} parent=0 // pred_check_branch
    %13 = sbr.rel (0) target = $region13
  $region12: #{_lambda_.9} parent=0 // pred_region
    _
  $region13: #{_lambda_.9} parent=0 // pred_fallthru
    _
  %v15 = vld [vmem:[%s0] sm:$0xff]
  %v16 = vld [vmem:[%s0 + $0x8] sm:$0xff]
  %v17 = vld [vmem:[%s0 + $0x10] sm:$0xff]
  %v18 = vld [vmem:[%s0 + $0x18] sm:$0xff]
  %v19 = vld [vmem:[%s0 + $0x20] sm:$0xff]
  %v20 = vld [vmem:[%s0 + $0x28] sm:$0xff]
  %v21 = vld [vmem:[%s0 + $0x30] sm:$0xff]
  %v22 = vld [vmem:[%s0 + $0x38] sm:$0xff]
  %v23 = vld [vmem:[%s1] sm:$0xf]
  %v24 = vld [vmem:[%s1 + $0x4] sm:$0xf]
  %v25 = vld [vmem:[%s1 + $0x8] sm:$0xf]
  %v26 = vld [vmem:[%s1 + $0xc] sm:$0xf]
  %v27 = vld [vmem:[%s1 + $0x10] sm:$0xf]
  %v28 = vld [vmem:[%s1 + $0x14] sm:$0xf]
  %v29 = vld [vmem:[%s1 + $0x18] sm:$0xf]
  %v30 = vld [vmem:[%s1 + $0x1c] sm:$0xf]
  %v31 = vld [vmem:[%s1 + $0x20] sm:$0xf]
  %v32 = vld [vmem:[%s1 + $0x24] sm:$0xf]
  %v33 = vld [vmem:[%s1 + $0x28] sm:$0xf]
  %v34 = vld [vmem:[%s1 + $0x2c] sm:$0xf]
  %v35 = vld [vmem:[%s1 + $0x30] sm:$0xf]
  %v36 = vld [vmem:[%s1 + $0x34] sm:$0xf]
  %v37 = vld [vmem:[%s1 + $0x38] sm:$0xf]
  %v38 = vld [vmem:[%s1 + $0x3c] sm:$0xf]
  %v39 = vld [vmem:[%s1 + $0x40] sm:$0xf]
  %v40 = vld [vmem:[%s1 + $0x44] sm:$0xf]
  %v41 = vld [vmem:[%s1 + $0x48] sm:$0xf]
  %v42 = vld [vmem:[%s1 + $0x4c] sm:$0xf]
  %v43 = vld [vmem:[%s1 + $0x50] sm:$0xf]
  %v44 = vld [vmem:[%s1 + $0x54] sm:$0xf]
  %v45 = vld [vmem:[%s1 + $0x58] sm:$0xf]
  %v46 = vld [vmem:[%s1 + $0x5c] sm:$0xf]
  %v47 = vld [vmem:[%s1 + $0x60] sm:$0xf]
  %v48 = vld [vmem:[%s1 + $0x64] sm:$0xf]
  %v49 = vld [vmem:[%s1 + $0x68] sm:$0xf]
  %v50 = vld [vmem:[%s1 + $0x6c] sm:$0xf]
  %v51 = vld [vmem:[%s1 + $0x70] sm:$0xf]
  %v52 = vld [vmem:[%s1 + $0x74] sm:$0xf]
  %v53 = vld [vmem:[%s1 + $0x78] sm:$0xf]
  %v54 = vld [vmem:[%s1 + $0x7c] sm:$0xf]
  %v55 = vld [vmem:[%s1 + $0x80] sm:$0xf]
  %v56 = vld [vmem:[%s1 + $0x84] sm:$0xf]
  %v57 = vld [vmem:[%s1 + $0x88] sm:$0xf]
  %v58 = vld [vmem:[%s1 + $0x8c] sm:$0xf]
  %v59 = vld [vmem:[%s1 + $0x90] sm:$0xf]
  %v60 = vld [vmem:[%s1 + $0x94] sm:$0xf]
  %v61 = vld [vmem:[%s1 + $0x98] sm:$0xf]
  %v62 = vld [vmem:[%s1 + $0x9c] sm:$0xf]
  %v63 = vld [vmem:[%s1 + $0xa0] sm:$0xf]
  %v64 = vld [vmem:[%s1 + $0xa4] sm:$0xf]
  %v65 = vld [vmem:[%s1 + $0xa8] sm:$0xf]
  %v66 = vld [vmem:[%s1 + $0xac] sm:$0xf]
  %v67 = vld [vmem:[%s1 + $0xb0] sm:$0xf]
  %v68 = vld [vmem:[%s1 + $0xb4] sm:$0xf]
  %v69 = vld [vmem:[%s1 + $0xb8] sm:$0xf]
  %v70 = vld [vmem:[%s1 + $0xbc] sm:$0xf]
  %v71 = vld [vmem:[%s1 + $0xc0] sm:$0xf]
  %v72 = vld [vmem:[%s1 + $0xc4] sm:$0xf]
  %v73 = vld [vmem:[%s1 + $0xc8] sm:$0xf]
  %v74 = vld [vmem:[%s1 + $0xcc] sm:$0xf]
  %v75 = vld [vmem:[%s1 + $0xd0] sm:$0xf]
  %v76 = vld [vmem:[%s1 + $0xd4] sm:$0xf]
  %v77 = vld [vmem:[%s1 + $0xd8] sm:$0xf]
  %v78 = vld [vmem:[%s1 + $0xdc] sm:$0xf]
  %v79 = vld [vmem:[%s1 + $0xe0] sm:$0xf]
  %v80 = vld [vmem:[%s1 + $0xe4] sm:$0xf]
  %v81 = vld [vmem:[%s1 + $0xe8] sm:$0xf]
  %v82 = vld [vmem:[%s1 + $0xec] sm:$0xf]
  %v83 = vld [vmem:[%s1 + $0xf0] sm:$0xf]
  %v84 = vld [vmem:[%s1 + $0xf4] sm:$0xf]
  %v85 = vld [vmem:[%s1 + $0xf8] sm:$0xf]
  %v86 = vld [vmem:[%s1 + $0xfc] sm:$0xf]
  %v87 = vld [vmem:[%s1 + $0x100] sm:$0xf]
  %v88 = vld [vmem:[%s1 + $0x104] sm:$0xf]
  %v89 = vld [vmem:[%s1 + $0x108] sm:$0xf]
  %v90 = vld [vmem:[%s1 + $0x10c] sm:$0xf]
  %v91 = vld [vmem:[%s1 + $0x110] sm:$0xf]
  %v92 = vld [vmem:[%s1 + $0x114] sm:$0xf]
  %v93 = vld [vmem:[%s1 + $0x118] sm:$0xf]
  %v94 = vld [vmem:[%s1 + $0x11c] sm:$0xf]
  %v95 = vld [vmem:[%s1 + $0x120] sm:$0xf]
  %v96 = vld [vmem:[%s1 + $0x124] sm:$0xf]
  %v97 = vld [vmem:[%s1 + $0x128] sm:$0xf]
  %v98 = vld [vmem:[%s1 + $0x12c] sm:$0xf]
  %v99 = vld [vmem:[%s1 + $0x130] sm:$0xf]
  %v100 = vld [vmem:[%s1 + $0x134] sm:$0xf]
  %v101 = vld [vmem:[%s1 + $0x138] sm:$0xf]
  %v102 = vld [vmem:[%s1 + $0x13c] sm:$0xf]
  %v103 = vld [vmem:[%s1 + $0x140] sm:$0xf]
  %v104 = vld [vmem:[%s1 + $0x144] sm:$0xf]
  %v105 = vld [vmem:[%s1 + $0x148] sm:$0xf]
  %v106 = vld [vmem:[%s1 + $0x14c] sm:$0xf]
  %v107 = vld [vmem:[%s1 + $0x150] sm:$0xf]
  %v108 = vld [vmem:[%s1 + $0x154] sm:$0xf]
  %v109 = vld [vmem:[%s1 + $0x158] sm:$0xf]
  %v110 = vld [vmem:[%s1 + $0x15c] sm:$0xf]
  %v111 = vld [vmem:[%s1 + $0x160] sm:$0xf]
  %v112 = vld [vmem:[%s1 + $0x164] sm:$0xf]
  %v113 = vld [vmem:[%s1 + $0x168] sm:$0xf]
  %v114 = vld [vmem:[%s1 + $0x16c] sm:$0xf]
  %v115 = vld [vmem:[%s1 + $0x170] sm:$0xf]
  %v116 = vld [vmem:[%s1 + $0x174] sm:$0xf]
  %v117 = vld [vmem:[%s1 + $0x178] sm:$0xf]
  %v118 = vld [vmem:[%s1 + $0x17c] sm:$0xf]
  %v119 = vld [vmem:[%s1 + $0x180] sm:$0xf]
  %v120 = vld [vmem:[%s1 + $0x184] sm:$0xf]
  %v121 = vld [vmem:[%s1 + $0x188] sm:$0xf]
  %v122 = vld [vmem:[%s1 + $0x18c] sm:$0xf]
  %v123 = vld [vmem:[%s1 + $0x190] sm:$0xf]
  %v124 = vld [vmem:[%s1 + $0x194] sm:$0xf]
  %v125 = vld [vmem:[%s1 + $0x198] sm:$0xf]
  %v126 = vld [vmem:[%s1 + $0x19c] sm:$0xf]
  %v127 = vld [vmem:[%s1 + $0x1a0] sm:$0xf]
  %v128 = vld [vmem:[%s1 + $0x1a4] sm:$0xf]
  %v129 = vld [vmem:[%s1 + $0x1a8] sm:$0xf]
  %v130 = vld [vmem:[%s1 + $0x1ac] sm:$0xf]
  %v131 = vld [vmem:[%s1 + $0x1b0] sm:$0xf]
  %v132 = vld [vmem:[%s1 + $0x1b4] sm:$0xf]
  %v133 = vld [vmem:[%s1 + $0x1b8] sm:$0xf]
  %v134 = vld [vmem:[%s1 + $0x1bc] sm:$0xf]
  %v135 = vld [vmem:[%s1 + $0x1c0] sm:$0xf]
  %v136 = vld [vmem:[%s1 + $0x1c4] sm:$0xf]
  %v137 = vld [vmem:[%s1 + $0x1c8] sm:$0xf]
  %v138 = vld [vmem:[%s1 + $0x1cc] sm:$0xf]
  %v139 = vld [vmem:[%s1 + $0x1d0] sm:$0xf]
  %v140 = vld [vmem:[%s1 + $0x1d4] sm:$0xf]
  %v141 = vld [vmem:[%s1 + $0x1d8] sm:$0xf]
  %v142 = vld [vmem:[%s1 + $0x1dc] sm:$0xf]
  %v143 = vld [vmem:[%s1 + $0x1e0] sm:$0xf]
  %v144 = vld [vmem:[%s1 + $0x1e4] sm:$0xf]
  %v145 = vld [vmem:[%s1 + $0x1e8] sm:$0xf]
  %v146 = vld [vmem:[%s1 + $0x1ec] sm:$0xf]
  %v147 = vld [vmem:[%s1 + $0x1f0] sm:$0xf]
  %v148 = vld [vmem:[%s1 + $0x1f4] sm:$0xf]
  %v149 = vld [vmem:[%s1 + $0x1f8] sm:$0xf]
  %v150 = vld [vmem:[%s1 + $0x1fc] sm:$0xf]
  %v151 = vld [vmem:[%s2] sm:$0x1]
  %v153 = vlaneseq
  %v154 = vshrl.u32 %v153, 7
  %v155 = vsub.s32 0, %v154
  %v156 = vrot.slane %v151, %v155
  %v166 = vunpack.c.l.b16 %v15
  %v167 = vunpack.c.h.b16 %v15
  %v168 = vunpack.c.l.b16 %v16
  %v169 = vunpack.c.h.b16 %v16
  %v170 = vunpack.c.l.b16 %v17
  %v171 = vunpack.c.h.b16 %v17
  %v172 = vunpack.c.l.b16 %v18
  %v173 = vunpack.c.h.b16 %v18
  %v174 = vunpack.c.l.b16 %v19
  %v175 = vunpack.c.h.b16 %v19
  %v176 = vunpack.c.l.b16 %v20
  %v177 = vunpack.c.h.b16 %v20
  %v178 = vunpack.c.l.b16 %v21
  %v179 = vunpack.c.h.b16 %v21
  %v180 = vunpack.c.l.b16 %v22
  %v181 = vunpack.c.h.b16 %v22
  %v182 = vpack.c.b16 %v174, %v166
  %v183 = vpack.c.b16 %v175, %v167
  %v184 = vpack.c.b16 %v176, %v168
  %v185 = vpack.c.b16 %v177, %v169
  %v186 = vpack.c.b16 %v178, %v170
  %v187 = vpack.c.b16 %v179, %v171
  %v188 = vpack.c.b16 %v180, %v172
  %v189 = vpack.c.b16 %v181, %v173
  %v326 = vunpack.c.l.b16 %v23
  %v327 = vunpack.c.l.b16 %v24
  %v328 = vunpack.c.l.b16 %v25
  %v329 = vunpack.c.l.b16 %v26
  %v330 = vunpack.c.l.b16 %v27
  %v331 = vunpack.c.l.b16 %v28
  %v332 = vunpack.c.l.b16 %v29
  %v333 = vunpack.c.l.b16 %v30
  %v334 = vunpack.c.l.b16 %v31
  %v335 = vunpack.c.l.b16 %v32
  %v336 = vunpack.c.l.b16 %v33
  %v337 = vunpack.c.l.b16 %v34
  %v338 = vunpack.c.l.b16 %v35
  %v339 = vunpack.c.l.b16 %v36
  %v340 = vunpack.c.l.b16 %v37
  %v341 = vunpack.c.l.b16 %v38
  %v342 = vunpack.c.l.b16 %v39
  %v343 = vunpack.c.l.b16 %v40
  %v344 = vunpack.c.l.b16 %v41
  %v345 = vunpack.c.l.b16 %v42
  %v346 = vunpack.c.l.b16 %v43
  %v347 = vunpack.c.l.b16 %v44
  %v348 = vunpack.c.l.b16 %v45
  %v349 = vunpack.c.l.b16 %v46
  %v350 = vunpack.c.l.b16 %v47
  %v351 = vunpack.c.l.b16 %v48
  %v352 = vunpack.c.l.b16 %v49
  %v353 = vunpack.c.l.b16 %v50
  %v354 = vunpack.c.l.b16 %v51
  %v355 = vunpack.c.l.b16 %v52
  %v356 = vunpack.c.l.b16 %v53
  %v357 = vunpack.c.l.b16 %v54
  %v358 = vunpack.c.l.b16 %v55
  %v359 = vunpack.c.l.b16 %v56
  %v360 = vunpack.c.l.b16 %v57
  %v361 = vunpack.c.l.b16 %v58
  %v362 = vunpack.c.l.b16 %v59
  %v363 = vunpack.c.l.b16 %v60
  %v364 = vunpack.c.l.b16 %v61
  %v365 = vunpack.c.l.b16 %v62
  %v366 = vunpack.c.l.b16 %v63
  %v367 = vunpack.c.l.b16 %v64
  %v368 = vunpack.c.l.b16 %v65
  %v369 = vunpack.c.l.b16 %v66
  %v370 = vunpack.c.l.b16 %v67
  %v371 = vunpack.c.l.b16 %v68
  %v372 = vunpack.c.l.b16 %v69
  %v373 = vunpack.c.l.b16 %v70
  %v374 = vunpack.c.l.b16 %v71
  %v375 = vunpack.c.l.b16 %v72
  %v376 = vunpack.c.l.b16 %v73
  %v377 = vunpack.c.l.b16 %v74
  %v378 = vunpack.c.l.b16 %v75
  %v379 = vunpack.c.l.b16 %v76
  %v380 = vunpack.c.l.b16 %v77
  %v381 = vunpack.c.l.b16 %v78
  %v382 = vunpack.c.l.b16 %v79
  %v383 = vunpack.c.l.b16 %v80
  %v384 = vunpack.c.l.b16 %v81
  %v385 = vunpack.c.l.b16 %v82
  %v386 = vunpack.c.l.b16 %v83
  %v387 = vunpack.c.l.b16 %v84
  %v388 = vunpack.c.l.b16 %v85
  %v389 = vunpack.c.l.b16 %v86
  %v390 = vunpack.c.l.b16 %v87
  %v391 = vunpack.c.l.b16 %v88
  %v392 = vunpack.c.l.b16 %v89
  %v393 = vunpack.c.l.b16 %v90
  %v394 = vunpack.c.l.b16 %v91
  %v395 = vunpack.c.l.b16 %v92
  %v396 = vunpack.c.l.b16 %v93
  %v397 = vunpack.c.l.b16 %v94
  %v398 = vunpack.c.l.b16 %v95
  %v399 = vunpack.c.l.b16 %v96
  %v400 = vunpack.c.l.b16 %v97
  %v401 = vunpack.c.l.b16 %v98
  %v402 = vunpack.c.l.b16 %v99
  %v403 = vunpack.c.l.b16 %v100
  %v404 = vunpack.c.l.b16 %v101
  %v405 = vunpack.c.l.b16 %v102
  %v406 = vunpack.c.l.b16 %v103
  %v407 = vunpack.c.l.b16 %v104
  %v408 = vunpack.c.l.b16 %v105
  %v409 = vunpack.c.l.b16 %v106
  %v410 = vunpack.c.l.b16 %v107
  %v411 = vunpack.c.l.b16 %v108
  %v412 = vunpack.c.l.b16 %v109
  %v413 = vunpack.c.l.b16 %v110
  %v414 = vunpack.c.l.b16 %v111
  %v415 = vunpack.c.l.b16 %v112
  %v416 = vunpack.c.l.b16 %v113
  %v417 = vunpack.c.l.b16 %v114
  %v418 = vunpack.c.l.b16 %v115
  %v419 = vunpack.c.l.b16 %v116
  %v420 = vunpack.c.l.b16 %v117
  %v421 = vunpack.c.l.b16 %v118
  %v422 = vunpack.c.l.b16 %v119
  %v423 = vunpack.c.l.b16 %v120
  %v424 = vunpack.c.l.b16 %v121
  %v425 = vunpack.c.l.b16 %v122
  %v426 = vunpack.c.l.b16 %v123
  %v427 = vunpack.c.l.b16 %v124
  %v428 = vunpack.c.l.b16 %v125
  %v429 = vunpack.c.l.b16 %v126
  %v430 = vunpack.c.l.b16 %v127
  %v431 = vunpack.c.l.b16 %v128
  %v432 = vunpack.c.l.b16 %v129
  %v433 = vunpack.c.l.b16 %v130
  %v434 = vunpack.c.l.b16 %v131
  %v435 = vunpack.c.l.b16 %v132
  %v436 = vunpack.c.l.b16 %v133
  %v437 = vunpack.c.l.b16 %v134
  %v438 = vunpack.c.l.b16 %v135
  %v439 = vunpack.c.l.b16 %v136
  %v440 = vunpack.c.l.b16 %v137
  %v441 = vunpack.c.l.b16 %v138
  %v442 = vunpack.c.l.b16 %v139
  %v443 = vunpack.c.l.b16 %v140
  %v444 = vunpack.c.l.b16 %v141
  %v445 = vunpack.c.l.b16 %v142
  %v446 = vunpack.c.l.b16 %v143
  %v447 = vunpack.c.l.b16 %v144
  %v448 = vunpack.c.l.b16 %v145
  %v449 = vunpack.c.l.b16 %v146
  %v450 = vunpack.c.l.b16 %v147
  %v451 = vunpack.c.l.b16 %v148
  %v452 = vunpack.c.l.b16 %v149
  %v453 = vunpack.c.l.b16 %v150
  %v454 = vpack.c.b16 %v327, %v326
  %v455 = vpack.c.b16 %v329, %v328
  %v456 = vpack.c.b16 %v331, %v330
  %v457 = vpack.c.b16 %v333, %v332
  %v458 = vpack.c.b16 %v335, %v334
  %v459 = vpack.c.b16 %v337, %v336
  %v460 = vpack.c.b16 %v339, %v338
  %v461 = vpack.c.b16 %v341, %v340
  %v462 = vpack.c.b16 %v343, %v342
  %v463 = vpack.c.b16 %v345, %v344
  %v464 = vpack.c.b16 %v347, %v346
  %v465 = vpack.c.b16 %v349, %v348
  %v466 = vpack.c.b16 %v351, %v350
  %v467 = vpack.c.b16 %v353, %v352
  %v468 = vpack.c.b16 %v355, %v354
  %v469 = vpack.c.b16 %v357, %v356
  %v470 = vpack.c.b16 %v359, %v358
  %v471 = vpack.c.b16 %v361, %v360
  %v472 = vpack.c.b16 %v363, %v362
  %v473 = vpack.c.b16 %v365, %v364
  %v474 = vpack.c.b16 %v367, %v366
  %v475 = vpack.c.b16 %v369, %v368
  %v476 = vpack.c.b16 %v371, %v370
  %v477 = vpack.c.b16 %v373, %v372
  %v478 = vpack.c.b16 %v375, %v374
  %v479 = vpack.c.b16 %v377, %v376
  %v480 = vpack.c.b16 %v379, %v378
  %v481 = vpack.c.b16 %v381, %v380
  %v482 = vpack.c.b16 %v383, %v382
  %v483 = vpack.c.b16 %v385, %v384
  %v484 = vpack.c.b16 %v387, %v386
  %v485 = vpack.c.b16 %v389, %v388
  %v486 = vpack.c.b16 %v391, %v390
  %v487 = vpack.c.b16 %v393, %v392
  %v488 = vpack.c.b16 %v395, %v394
  %v489 = vpack.c.b16 %v397, %v396
  %v490 = vpack.c.b16 %v399, %v398
  %v491 = vpack.c.b16 %v401, %v400
  %v492 = vpack.c.b16 %v403, %v402
  %v493 = vpack.c.b16 %v405, %v404
  %v494 = vpack.c.b16 %v407, %v406
  %v495 = vpack.c.b16 %v409, %v408
  %v496 = vpack.c.b16 %v411, %v410
  %v497 = vpack.c.b16 %v413, %v412
  %v498 = vpack.c.b16 %v415, %v414
  %v499 = vpack.c.b16 %v417, %v416
  %v500 = vpack.c.b16 %v419, %v418
  %v501 = vpack.c.b16 %v421, %v420
  %v502 = vpack.c.b16 %v423, %v422
  %v503 = vpack.c.b16 %v425, %v424
  %v504 = vpack.c.b16 %v427, %v426
  %v505 = vpack.c.b16 %v429, %v428
  %v506 = vpack.c.b16 %v431, %v430
  %v507 = vpack.c.b16 %v433, %v432
  %v508 = vpack.c.b16 %v435, %v434
  %v509 = vpack.c.b16 %v437, %v436
  %v510 = vpack.c.b16 %v439, %v438
  %v511 = vpack.c.b16 %v441, %v440
  %v512 = vpack.c.b16 %v443, %v442
  %v513 = vpack.c.b16 %v445, %v444
  %v514 = vpack.c.b16 %v447, %v446
  %v515 = vpack.c.b16 %v449, %v448
  %v516 = vpack.c.b16 %v451, %v450
  %v517 = vpack.c.b16 %v453, %v452
  %582 = vmatprep.subr.bf16.mxu0 0
  %583 = vmatpush1.bf16.msra.mxu0 %v461
  %584 = vmatprep.subr.bf16.mxu0 0
  %585 = vmatpush1.bf16.msra.mxu0 %v460
  %586 = vmatprep.subr.bf16.mxu0 0
  %587 = vmatpush1.bf16.msra.mxu0 %v459
  %588 = vmatprep.subr.bf16.mxu0 0
  %589 = vmatpush1.bf16.msra.mxu0 %v458
  %590 = vmatprep.subr.bf16.mxu0 0
  %591 = vmatpush1.bf16.msra.mxu0 %v457
  %592 = vmatprep.subr.bf16.mxu0 0
  %593 = vmatpush1.bf16.msra.mxu0 %v456
  %594 = vmatprep.subr.bf16.mxu0 0
  %595 = vmatpush1.bf16.msra.mxu0 %v455
  %596 = vmatprep.subr.bf16.mxu0 0
  %597 = vmatpush1.bf16.msra.mxu0 %v454
  %598 = vmatprep.subr.bf16.mxu0 0
  %599 = vmatpush2.bf16.msra.mxu0 %v469
  %600 = vmatprep.subr.bf16.mxu0 0
  %601 = vmatpush2.bf16.msra.mxu0 %v468
  %602 = vmatprep.subr.bf16.mxu0 0
  %603 = vmatpush2.bf16.msra.mxu0 %v467
  %604 = vmatprep.subr.bf16.mxu0 0
  %605 = vmatpush2.bf16.msra.mxu0 %v466
  %606 = vmatprep.subr.bf16.mxu0 0
  %607 = vmatpush2.bf16.msra.mxu0 %v465
  %608 = vmatprep.subr.bf16.mxu0 0
  %609 = vmatpush2.bf16.msra.mxu0 %v464
  %610 = vmatprep.subr.bf16.mxu0 0
  %611 = vmatpush2.bf16.msra.mxu0 %v463
  %612 = vmatprep.subr.bf16.mxu0 0
  %613 = vmatpush2.bf16.msra.mxu0 %v462
  %614 = vmatprep.mubr.bf16.mxu0 %v183
  %615 = vmatmul.mubr.bf16.gmra.mxu0 %v182
  %v616 = vpop.f32.mrf.mxu0
  %v617 = vadd.f32 %v156, %v616
  %v618 = vpop.f32.mrf.mxu0
  %v619 = vpop.f32.mrf.mxu0
  %v620 = vadd.f32 %v156, %v619
  %v621 = vpop.f32.mrf.mxu0
  %622 = vdwg.mxu0
  %623 = vmatprep.subr.bf16.mxu0 0
  %624 = vmatpush1.bf16.msra.mxu0 %v477
  %625 = vmatprep.subr.bf16.mxu0 0
  %626 = vmatpush1.bf16.msra.mxu0 %v476
  %627 = vmatprep.subr.bf16.mxu0 0
  %628 = vmatpush1.bf16.msra.mxu0 %v475
  %629 = vmatprep.subr.bf16.mxu0 0
  %630 = vmatpush1.bf16.msra.mxu0 %v474
  %631 = vmatprep.subr.bf16.mxu0 0
  %632 = vmatpush1.bf16.msra.mxu0 %v473
  %633 = vmatprep.subr.bf16.mxu0 0
  %634 = vmatpush1.bf16.msra.mxu0 %v472
  %635 = vmatprep.subr.bf16.mxu0 0
  %636 = vmatpush1.bf16.msra.mxu0 %v471
  %637 = vmatprep.subr.bf16.mxu0 0
  %638 = vmatpush1.bf16.msra.mxu0 %v470
  %639 = vmatprep.subr.bf16.mxu0 0
  %640 = vmatpush2.bf16.msra.mxu0 %v485
  %641 = vmatprep.subr.bf16.mxu0 0
  %642 = vmatpush2.bf16.msra.mxu0 %v484
  %643 = vmatprep.subr.bf16.mxu0 0
  %644 = vmatpush2.bf16.msra.mxu0 %v483
  %645 = vmatprep.subr.bf16.mxu0 0
  %646 = vmatpush2.bf16.msra.mxu0 %v482
  %647 = vmatprep.subr.bf16.mxu0 0
  %648 = vmatpush2.bf16.msra.mxu0 %v481
  %649 = vmatprep.subr.bf16.mxu0 0
  %650 = vmatpush2.bf16.msra.mxu0 %v480
  %651 = vmatprep.subr.bf16.mxu0 0
  %652 = vmatpush2.bf16.msra.mxu0 %v479
  %653 = vmatprep.subr.bf16.mxu0 0
  %654 = vmatpush2.bf16.msra.mxu0 %v478
  %655 = vmatprep.mubr.bf16.mxu0 %v185
  %656 = vmatmul.mubr.bf16.gmra.mxu0 %v184
  %v657 = vpop.f32.mrf.mxu0
  %v658 = vadd.f32 %v617, %v657
  %v659 = vpop.f32.mrf.mxu0
  %v660 = vpop.f32.mrf.mxu0
  %v661 = vadd.f32 %v620, %v660
  %v662 = vpop.f32.mrf.mxu0
  %663 = vdwg.mxu0
  %664 = vmatprep.subr.bf16.mxu0 0
  %665 = vmatpush1.bf16.msra.mxu0 %v493
  %666 = vmatprep.subr.bf16.mxu0 0
  %667 = vmatpush1.bf16.msra.mxu0 %v492
  %668 = vmatprep.subr.bf16.mxu0 0
  %669 = vmatpush1.bf16.msra.mxu0 %v491
  %670 = vmatprep.subr.bf16.mxu0 0
  %671 = vmatpush1.bf16.msra.mxu0 %v490
  %672 = vmatprep.subr.bf16.mxu0 0
  %673 = vmatpush1.bf16.msra.mxu0 %v489
  %674 = vmatprep.subr.bf16.mxu0 0
  %675 = vmatpush1.bf16.msra.mxu0 %v488
  %676 = vmatprep.subr.bf16.mxu0 0
  %677 = vmatpush1.bf16.msra.mxu0 %v487
  %678 = vmatprep.subr.bf16.mxu0 0
  %679 = vmatpush1.bf16.msra.mxu0 %v486
  %680 = vmatprep.subr.bf16.mxu0 0
  %681 = vmatpush2.bf16.msra.mxu0 %v501
  %682 = vmatprep.subr.bf16.mxu0 0
  %683 = vmatpush2.bf16.msra.mxu0 %v500
  %684 = vmatprep.subr.bf16.mxu0 0
  %685 = vmatpush2.bf16.msra.mxu0 %v499
  %686 = vmatprep.subr.bf16.mxu0 0
  %687 = vmatpush2.bf16.msra.mxu0 %v498
  %688 = vmatprep.subr.bf16.mxu0 0
  %689 = vmatpush2.bf16.msra.mxu0 %v497
  %690 = vmatprep.subr.bf16.mxu0 0
  %691 = vmatpush2.bf16.msra.mxu0 %v496
  %692 = vmatprep.subr.bf16.mxu0 0
  %693 = vmatpush2.bf16.msra.mxu0 %v495
  %694 = vmatprep.subr.bf16.mxu0 0
  %695 = vmatpush2.bf16.msra.mxu0 %v494
  %696 = vmatprep.mubr.bf16.mxu0 %v187
  %697 = vmatmul.mubr.bf16.gmra.mxu0 %v186
  %v698 = vpop.f32.mrf.mxu0
  %v699 = vadd.f32 %v658, %v698
  %v700 = vpop.f32.mrf.mxu0
  %v701 = vpop.f32.mrf.mxu0
  %v702 = vadd.f32 %v661, %v701
  %v703 = vpop.f32.mrf.mxu0
  %704 = vdwg.mxu0
  %705 = vmatprep.subr.bf16.mxu0 0
  %706 = vmatpush1.bf16.msra.mxu0 %v509
  %707 = vmatprep.subr.bf16.mxu0 0
  %708 = vmatpush1.bf16.msra.mxu0 %v508
  %709 = vmatprep.subr.bf16.mxu0 0
  %710 = vmatpush1.bf16.msra.mxu0 %v507
  %711 = vmatprep.subr.bf16.mxu0 0
  %712 = vmatpush1.bf16.msra.mxu0 %v506
  %713 = vmatprep.subr.bf16.mxu0 0
  %714 = vmatpush1.bf16.msra.mxu0 %v505
  %715 = vmatprep.subr.bf16.mxu0 0
  %716 = vmatpush1.bf16.msra.mxu0 %v504
  %717 = vmatprep.subr.bf16.mxu0 0
  %718 = vmatpush1.bf16.msra.mxu0 %v503
  %719 = vmatprep.subr.bf16.mxu0 0
  %720 = vmatpush1.bf16.msra.mxu0 %v502
  %721 = vmatprep.subr.bf16.mxu0 0
  %722 = vmatpush2.bf16.msra.mxu0 %v517
  %723 = vmatprep.subr.bf16.mxu0 0
  %724 = vmatpush2.bf16.msra.mxu0 %v516
  %725 = vmatprep.subr.bf16.mxu0 0
  %726 = vmatpush2.bf16.msra.mxu0 %v515
  %727 = vmatprep.subr.bf16.mxu0 0
  %728 = vmatpush2.bf16.msra.mxu0 %v514
  %729 = vmatprep.subr.bf16.mxu0 0
  %730 = vmatpush2.bf16.msra.mxu0 %v513
  %731 = vmatprep.subr.bf16.mxu0 0
  %732 = vmatpush2.bf16.msra.mxu0 %v512
  %733 = vmatprep.subr.bf16.mxu0 0
  %734 = vmatpush2.bf16.msra.mxu0 %v511
  %735 = vmatprep.subr.bf16.mxu0 0
  %736 = vmatpush2.bf16.msra.mxu0 %v510
  %737 = vmatprep.mubr.bf16.mxu0 %v189
  %738 = vmatmul.mubr.bf16.gmra.mxu0 %v188
  %v739 = vpop.f32.mrf.mxu0
  %v740 = vadd.f32 %v699, %v739
  %v741 = vpop.f32.mrf.mxu0
  %v742 = vpop.f32.mrf.mxu0
  %v743 = vadd.f32 %v702, %v742
  %v744 = vpop.f32.mrf.mxu0
  %745 = vdwg.mxu0
  %746 = vst [vmem:[%s3] sm:$0xff] %v740
  %747 = vst [vmem:[%s3 + $0x8] sm:$0xff] %v743
  // Predicated region
  $region14: #{_lambda_.9} parent=0 // pred_check
    _
  $region15: #{_lambda_.9} parent=0 // pred_check_branch
    %749 = sbr.rel (0) target = $region17
  $region16: #{_lambda_.9} parent=0 // pred_region
    _
  $region17: #{_lambda_.9} parent=0 // pred_fallthru
    _
  // Predicated region
  $region18: #{_lambda_.9} parent=0 // pred_check
    _
  $region19: #{_lambda_.9} parent=0 // pred_check_branch
    %751 = sbr.rel (0) target = $region21
  $region20: #{_lambda_.9} parent=0 // pred_region
    _
  $region21: #{_lambda_.9} parent=0 // pred_fallthru
    _

</llo_original>
